<compile_context>
chip_gen: v5e
topology: v5e:2x2
jax: 0.10.0
libtpu: 0.0.40
codegen_flags: <defaults>
</compile_context>

<pallas_src>
import math

import jax
import jax.numpy as jnp
from jax.experimental import pallas as pl
from jax.experimental.pallas import tpu as pltpu


def _swish(x):
    # x * sigmoid(x), exact, in f32 (exp on the EUP, divide is cheap).
    return x * (1.0 / (1.0 + jnp.exp(-x)))


def decoder_kernel(z_ref,
                   w1_ref, b1_ref,
                   w2_ref, b2_ref,
                   w3_ref, b3_ref,
                   w4_ref, b4_ref,
                   out_ref):
    def layer(h_bf16, w_ref, b_ref):
        # bf16 x bf16 MXU matmul with f32 accumulation; bias add in f32.
        acc = jnp.dot(h_bf16, w_ref[...], preferred_element_type=jnp.float32)
        return acc + b_ref[...]

    h = _swish(layer(z_ref[...], w1_ref, b1_ref)).astype(jnp.bfloat16)
    h = _swish(layer(h, w2_ref, b2_ref)).astype(jnp.bfloat16)
    h = _swish(layer(h, w3_ref, b3_ref)).astype(jnp.bfloat16)
    out_ref[...] = layer(h, w4_ref, b4_ref).astype(out_ref.dtype)


def _round_up(x, m):
    return -(-x // m) * m


def _choose_batch_tile(B, batch_tile):
    """Largest tile that fits the request; multiples of 256 for full MXU M
    tiles when tiling, sublane (8) alignment for a single small tile."""
    if B <= batch_tile:
        return max(8, _round_up(B, 8))
    if batch_tile >= 256:
        return (batch_tile // 256) * 256
    return max(8, (batch_tile // 8) * 8)


def prepare_decoder_params(params, out_dtype=jnp.float32):
    """One-time prep: bf16 weights (stored (in, out) = PyTorch W^T), f32
    biases, last-layer out dim padded to a multiple of 128 for lane-dense
    output stores.  Reuse the result across forward calls."""
    out_dim = int(params["w4"].shape[1])
    out_dim_p = _round_up(out_dim, 128)
    pad = out_dim_p - out_dim

    prepared = {"out_dim": out_dim, "out_dim_p": out_dim_p,
                "hidden": int(params["w1"].shape[1]),
                "n_latents": int(params["w1"].shape[0]),
                "out_dtype": out_dtype}
    for i in range(1, 5):
        w = params[f"w{i}"].astype(jnp.float32)
        b = params[f"b{i}"].astype(jnp.float32).reshape(1, -1)
        if i == 4 and pad:
            w = jnp.pad(w, ((0, 0), (0, pad)))
            b = jnp.pad(b, ((0, 0), (0, pad)))
        prepared[f"w{i}"] = w.astype(jnp.bfloat16)  # MXU fast path, half the DMA
        prepared[f"b{i}"] = b                       # bias add stays f32
    return prepared


def _vmem_limit_bytes(bt, n_latents, hidden, out_dim_p, out_itemsize,
                      param_bytes):
    in_bytes = 2 * bt * n_latents * 2                 # double-buffered bf16 z tile
    out_bytes = 2 * bt * out_dim_p * out_itemsize     # double-buffered output tile
    act_bytes = bt * (3 * hidden + out_dim_p) * 4     # live f32 activations + acc
    total = in_bytes + out_bytes + 2 * param_bytes + act_bytes
    # 2x margin for compiler temporaries; clamp to a range safe on v7x (64 MiB).
    return int(min(max(2 * total, 8 << 20), 56 << 20))


def image_decoder_forward(z, prepared, *, batch_tile=1024):
    """z: (B, n_latents) float32.  prepared: output of prepare_decoder_params.
    Returns (B, nc*nv*nh) in prepared['out_dtype'] (default float32)."""
    B, n_latents = z.shape
    assert n_latents == prepared["n_latents"]
    out_dim = prepared["out_dim"]
    out_dim_p = prepared["out_dim_p"]
    out_dtype = prepared["out_dtype"]
    hidden = prepared["hidden"]

    bt = _choose_batch_tile(B, batch_tile)
    num_tiles = math.ceil(B / bt)
    Bp = num_tiles * bt
    zp = (z if Bp == B else jnp.pad(z, ((0, Bp - B), (0, 0)))).astype(jnp.bfloat16)

    args = (zp,
            prepared["w1"], prepared["b1"],
            prepared["w2"], prepared["b2"],
            prepared["w3"], prepared["b3"],
            prepared["w4"], prepared["b4"])
    param_bytes = sum(int(a.size) * a.dtype.itemsize for a in args[1:])

    flops = 2 * Bp * (n_latents * hidden + hidden * hidden * 2
                      + hidden * out_dim_p)
    transcendentals = Bp * 3 * hidden  # one exp per swish unit
    bytes_accessed = (sum(int(a.size) * a.dtype.itemsize for a in args)
                      + Bp * out_dim_p * jnp.dtype(out_dtype).itemsize)
    cost = pl.CostEstimate(flops=int(flops),
                           transcendentals=int(transcendentals),
                           bytes_accessed=int(bytes_accessed))

    def const_spec(shape):
        return pl.BlockSpec(shape, lambda i: (0, 0))

    grid_spec = pltpu.PrefetchScalarGridSpec(
        num_scalar_prefetch=0,
        grid=(num_tiles,),
        in_specs=[pl.BlockSpec((bt, n_latents), lambda i: (i, 0))]
                 + [const_spec(a.shape) for a in args[1:]],
        out_specs=pl.BlockSpec((bt, out_dim_p), lambda i: (i, 0)),
    )

    out = pl.pallas_call(
        decoder_kernel,
        out_shape=jax.ShapeDtypeStruct((Bp, out_dim_p), out_dtype),
        grid_spec=grid_spec,
        compiler_params=pltpu.CompilerParams(
            dimension_semantics=("parallel",),
            vmem_limit_bytes=_vmem_limit_bytes(
                bt, n_latents, hidden, out_dim_p,
                jnp.dtype(out_dtype).itemsize, param_bytes),
        ),
        cost_estimate=cost,
    )(*args)
    return out[:B, :out_dim]


def init_params(key, n_latents, nc, nv, nh):
    """Deterministic init mimicking torch.nn.Linear default U(-1/sqrt(fan_in), +)."""
    dims = [(n_latents, 256), (256, 256), (256, 256), (256, nc * nv * nh)]
    params = {}
    for idx, (fan_in, fan_out) in enumerate(dims, start=1):
        key, kw, kb = jax.random.split(key, 3)
        bound = 1.0 / jnp.sqrt(jnp.float32(fan_in))
        # stored as (in, out)  ==  transpose of PyTorch's (out, in)
        params[f"w{idx}"] = jax.random.uniform(
            kw, (fan_in, fan_out), jnp.float32, minval=-bound, maxval=bound)
        params[f"b{idx}"] = jax.random.uniform(
            kb, (1, fan_out), jnp.float32, minval=-bound, maxval=bound)
    return params


def reference_forward(z, params, matmul_dtype=jnp.float32):
    """Pure-JAX reference; matmul_dtype=bfloat16 mirrors the kernel's MXU math."""
    def lin(h, w, b):
        return jnp.dot(h.astype(matmul_dtype), w.astype(matmul_dtype),
                       preferred_element_type=jnp.float32) + b

    h = lin(z, params["w1"], params["b1"])
    h = h * jax.nn.sigmoid(h)
    h = lin(h, params["w2"], params["b2"])
    h = h * jax.nn.sigmoid(h)
    h = lin(h, params["w3"], params["b3"])
    h = h * jax.nn.sigmoid(h)
    return lin(h, params["w4"], params["b4"])


if __name__ == "__main__":
    # Small shapes consistent with the module: decoder for nc=4, nv=16, nh=16 images.
    B, n_latents, nc, nv, nh = 8, 32, 4, 16, 16

    key = jax.random.PRNGKey(0)
    key, kz, kz2 = jax.random.split(key, 3)
    z = jax.random.normal(kz, (B, n_latents), jnp.float32)
    params = init_params(key, n_latents, nc, nv, nh)

    # Cast / pad weights ONCE; reuse across forwards (no per-call HBM cast pass).
    prepared = prepare_decoder_params(params)

    out = jax.block_until_ready(image_decoder_forward(z, prepared))
    ref = reference_forward(z, params, matmul_dtype=jnp.bfloat16)
    assert out.shape == (B, nc * nv * nh)
    assert jnp.allclose(out, ref, atol=2e-2, rtol=2e-2), \
        float(jnp.max(jnp.abs(out - ref)))

    # Exercise the multi-tile + ragged-batch padding path (grid >= 2).
    B2 = 200
    z2 = jax.random.normal(kz2, (B2, n_latents), jnp.float32)
    out2 = jax.block_until_ready(
        image_decoder_forward(z2, prepared, batch_tile=128))
    ref2 = reference_forward(z2, params, matmul_dtype=jnp.bfloat16)
    assert out2.shape == (B2, nc * nv * nh)
    assert jnp.allclose(out2, ref2, atol=2e-2, rtol=2e-2), \
        float(jnp.max(jnp.abs(out2 - ref2)))

    print("KERNEL_OK")
</pallas_src>

<mosaic_0001>
module attributes {stable_mosaic.version = 11 : i64} {
  func.func @decoder_kernel(%arg0: i32, %arg1: memref<8x32xbf16, #tpu.memory_space<vmem>>, %arg2: memref<32x256xbf16, #tpu.memory_space<vmem>>, %arg3: memref<1x256xf32, #tpu.memory_space<vmem>>, %arg4: memref<256x256xbf16, #tpu.memory_space<vmem>>, %arg5: memref<1x256xf32, #tpu.memory_space<vmem>>, %arg6: memref<256x256xbf16, #tpu.memory_space<vmem>>, %arg7: memref<1x256xf32, #tpu.memory_space<vmem>>, %arg8: memref<256x1024xbf16, #tpu.memory_space<vmem>>, %arg9: memref<1x1024xf32, #tpu.memory_space<vmem>>, %arg10: memref<8x1024xf32, #tpu.memory_space<vmem>>) attributes {dimension_semantics = [#tpu.dimension_semantics<parallel>], iteration_bounds = array<i64: 1>, scalar_prefetch = 0 : i64, scratch_operands = 0 : i64, tpu.core_type = #tpu.core_type<tc>, window_params = [{transform_indices = @transform_0, window_bounds = array<i64: 8, 32>}, {pipeline_mode = #tpu.pipeline_mode<synchronous>, transform_indices = @transform_1, window_bounds = array<i64: 32, 256>}, {pipeline_mode = #tpu.pipeline_mode<synchronous>, transform_indices = @transform_2, window_bounds = array<i64: 1, 256>}, {pipeline_mode = #tpu.pipeline_mode<synchronous>, transform_indices = @transform_3, window_bounds = array<i64: 256, 256>}, {pipeline_mode = #tpu.pipeline_mode<synchronous>, transform_indices = @transform_4, window_bounds = array<i64: 1, 256>}, {pipeline_mode = #tpu.pipeline_mode<synchronous>, transform_indices = @transform_5, window_bounds = array<i64: 256, 256>}, {pipeline_mode = #tpu.pipeline_mode<synchronous>, transform_indices = @transform_6, window_bounds = array<i64: 1, 256>}, {pipeline_mode = #tpu.pipeline_mode<synchronous>, transform_indices = @transform_7, window_bounds = array<i64: 256, 1024>}, {pipeline_mode = #tpu.pipeline_mode<synchronous>, transform_indices = @transform_8, window_bounds = array<i64: 1, 1024>}, {transform_indices = @transform_9, window_bounds = array<i64: 8, 1024>}]} {
    %c0 = arith.constant 0 : index
    %c0_0 = arith.constant 0 : index
    %0 = vector.load %arg1[%c0, %c0_0] : memref<8x32xbf16, #tpu.memory_space<vmem>>, vector<8x32xbf16>
    %c0_1 = arith.constant 0 : index
    %c0_2 = arith.constant 0 : index
    %1 = vector.load %arg2[%c0_1, %c0_2] : memref<32x256xbf16, #tpu.memory_space<vmem>>, vector<32x256xbf16>
    %cst = arith.constant dense<0.000000e+00> : vector<8x256xf32>
    %2 = tpu.matmul %0, %1, %cst {dimension_numbers = #tpu.dot_dimension_numbers<[1], [0], [0], [1], [0, 0, 1, 1], [], []>} : vector<8x32xbf16>, vector<32x256xbf16>, vector<8x256xf32> -> vector<8x256xf32>
    %c0_3 = arith.constant 0 : index
    %c0_4 = arith.constant 0 : index
    %3 = vector.load %arg3[%c0_3, %c0_4] : memref<1x256xf32, #tpu.memory_space<vmem>>, vector<1x256xf32>
    %4 = vector.broadcast %3 : vector<1x256xf32> to vector<8x256xf32>
    %5 = arith.addf %2, %4 : vector<8x256xf32>
    %cst_5 = arith.constant 0.000000e+00 : f32
    %6 = vector.broadcast %cst_5 : f32 to vector<8x256xf32>
    %7 = arith.subf %6, %5 : vector<8x256xf32>
    %8 = math.exp %7 : vector<8x256xf32>
    %cst_6 = arith.constant 1.000000e+00 : f32
    %9 = vector.broadcast %cst_6 : f32 to vector<8x256xf32>
    %10 = arith.addf %9, %8 : vector<8x256xf32>
    %cst_7 = arith.constant 1.000000e+00 : f32
    %11 = vector.broadcast %cst_7 : f32 to vector<8x256xf32>
    %12 = arith.divf %11, %10 : vector<8x256xf32>
    %13 = arith.mulf %5, %12 : vector<8x256xf32>
    %14 = arith.truncf %13 : vector<8x256xf32> to vector<8x256xbf16>
    %c0_8 = arith.constant 0 : index
    %c0_9 = arith.constant 0 : index
    %15 = vector.load %arg4[%c0_8, %c0_9] : memref<256x256xbf16, #tpu.memory_space<vmem>>, vector<256x256xbf16>
    %cst_10 = arith.constant dense<0.000000e+00> : vector<8x256xf32>
    %16 = tpu.matmul %14, %15, %cst_10 {dimension_numbers = #tpu.dot_dimension_numbers<[1], [0], [0], [1], [0, 0, 1, 1], [], []>} : vector<8x256xbf16>, vector<256x256xbf16>, vector<8x256xf32> -> vector<8x256xf32>
    %c0_11 = arith.constant 0 : index
    %c0_12 = arith.constant 0 : index
    %17 = vector.load %arg5[%c0_11, %c0_12] : memref<1x256xf32, #tpu.memory_space<vmem>>, vector<1x256xf32>
    %18 = vector.broadcast %17 : vector<1x256xf32> to vector<8x256xf32>
    %19 = arith.addf %16, %18 : vector<8x256xf32>
    %cst_13 = arith.constant 0.000000e+00 : f32
    %20 = vector.broadcast %cst_13 : f32 to vector<8x256xf32>
    %21 = arith.subf %20, %19 : vector<8x256xf32>
    %22 = math.exp %21 : vector<8x256xf32>
    %cst_14 = arith.constant 1.000000e+00 : f32
    %23 = vector.broadcast %cst_14 : f32 to vector<8x256xf32>
    %24 = arith.addf %23, %22 : vector<8x256xf32>
    %cst_15 = arith.constant 1.000000e+00 : f32
    %25 = vector.broadcast %cst_15 : f32 to vector<8x256xf32>
    %26 = arith.divf %25, %24 : vector<8x256xf32>
    %27 = arith.mulf %19, %26 : vector<8x256xf32>
    %28 = arith.truncf %27 : vector<8x256xf32> to vector<8x256xbf16>
    %c0_16 = arith.constant 0 : index
    %c0_17 = arith.constant 0 : index
    %29 = vector.load %arg6[%c0_16, %c0_17] : memref<256x256xbf16, #tpu.memory_space<vmem>>, vector<256x256xbf16>
    %cst_18 = arith.constant dense<0.000000e+00> : vector<8x256xf32>
    %30 = tpu.matmul %28, %29, %cst_18 {dimension_numbers = #tpu.dot_dimension_numbers<[1], [0], [0], [1], [0, 0, 1, 1], [], []>} : vector<8x256xbf16>, vector<256x256xbf16>, vector<8x256xf32> -> vector<8x256xf32>
    %c0_19 = arith.constant 0 : index
    %c0_20 = arith.constant 0 : index
    %31 = vector.load %arg7[%c0_19, %c0_20] : memref<1x256xf32, #tpu.memory_space<vmem>>, vector<1x256xf32>
    %32 = vector.broadcast %31 : vector<1x256xf32> to vector<8x256xf32>
    %33 = arith.addf %30, %32 : vector<8x256xf32>
    %cst_21 = arith.constant 0.000000e+00 : f32
    %34 = vector.broadcast %cst_21 : f32 to vector<8x256xf32>
    %35 = arith.subf %34, %33 : vector<8x256xf32>
    %36 = math.exp %35 : vector<8x256xf32>
    %cst_22 = arith.constant 1.000000e+00 : f32
    %37 = vector.broadcast %cst_22 : f32 to vector<8x256xf32>
    %38 = arith.addf %37, %36 : vector<8x256xf32>
    %cst_23 = arith.constant 1.000000e+00 : f32
    %39 = vector.broadcast %cst_23 : f32 to vector<8x256xf32>
    %40 = arith.divf %39, %38 : vector<8x256xf32>
    %41 = arith.mulf %33, %40 : vector<8x256xf32>
    %42 = arith.truncf %41 : vector<8x256xf32> to vector<8x256xbf16>
    %c0_24 = arith.constant 0 : index
    %c0_25 = arith.constant 0 : index
    %43 = vector.load %arg8[%c0_24, %c0_25] : memref<256x1024xbf16, #tpu.memory_space<vmem>>, vector<256x1024xbf16>
    %cst_26 = arith.constant dense<0.000000e+00> : vector<8x1024xf32>
    %44 = tpu.matmul %42, %43, %cst_26 {dimension_numbers = #tpu.dot_dimension_numbers<[1], [0], [0], [1], [0, 0, 1, 1], [], []>} : vector<8x256xbf16>, vector<256x1024xbf16>, vector<8x1024xf32> -> vector<8x1024xf32>
    %c0_27 = arith.constant 0 : index
    %c0_28 = arith.constant 0 : index
    %45 = vector.load %arg9[%c0_27, %c0_28] : memref<1x1024xf32, #tpu.memory_space<vmem>>, vector<1x1024xf32>
    %46 = vector.broadcast %45 : vector<1x1024xf32> to vector<8x1024xf32>
    %47 = arith.addf %44, %46 : vector<8x1024xf32>
    %c0_29 = arith.constant 0 : index
    %c0_30 = arith.constant 0 : index
    %48 = vector.load %arg10[%c0_29, %c0_30] : memref<8x1024xf32, #tpu.memory_space<vmem>>, vector<8x1024xf32>
    tpu.vector_store %arg10[%c0_29, %c0_30], %47 {strides = array<i32>} : memref<8x1024xf32, #tpu.memory_space<vmem>>, vector<8x1024xf32>,
    return
  }
  func.func @transform_0(%arg0: i32) -> (i32, i32) {
    %c0_i32 = arith.constant 0 : i32
    %c0_i32_0 = arith.constant 0 : i32
    return %arg0, %c0_i32 : i32, i32
  }
  func.func @transform_1(%arg0: i32) -> (i32, i32) {
    %c0_i32 = arith.constant 0 : i32
    %c0_i32_0 = arith.constant 0 : i32
    %c0_i32_1 = arith.constant 0 : i32
    return %c0_i32, %c0_i32_0 : i32, i32
  }
  func.func @transform_2(%arg0: i32) -> (i32, i32) {
    %c0_i32 = arith.constant 0 : i32
    %c0_i32_0 = arith.constant 0 : i32
    %c0_i32_1 = arith.constant 0 : i32
    return %c0_i32, %c0_i32_0 : i32, i32
  }
  func.func @transform_3(%arg0: i32) -> (i32, i32) {
    %c0_i32 = arith.constant 0 : i32
    %c0_i32_0 = arith.constant 0 : i32
    %c0_i32_1 = arith.constant 0 : i32
    return %c0_i32, %c0_i32_0 : i32, i32
  }
  func.func @transform_4(%arg0: i32) -> (i32, i32) {
    %c0_i32 = arith.constant 0 : i32
    %c0_i32_0 = arith.constant 0 : i32
    %c0_i32_1 = arith.constant 0 : i32
    return %c0_i32, %c0_i32_0 : i32, i32
  }
  func.func @transform_5(%arg0: i32) -> (i32, i32) {
    %c0_i32 = arith.constant 0 : i32
    %c0_i32_0 = arith.constant 0 : i32
    %c0_i32_1 = arith.constant 0 : i32
    return %c0_i32, %c0_i32_0 : i32, i32
  }
  func.func @transform_6(%arg0: i32) -> (i32, i32) {
    %c0_i32 = arith.constant 0 : i32
    %c0_i32_0 = arith.constant 0 : i32
    %c0_i32_1 = arith.constant 0 : i32
    return %c0_i32, %c0_i32_0 : i32, i32
  }
  func.func @transform_7(%arg0: i32) -> (i32, i32) {
    %c0_i32 = arith.constant 0 : i32
    %c0_i32_0 = arith.constant 0 : i32
    %c0_i32_1 = arith.constant 0 : i32
    return %c0_i32, %c0_i32_0 : i32, i32
  }
  func.func @transform_8(%arg0: i32) -> (i32, i32) {
    %c0_i32 = arith.constant 0 : i32
    %c0_i32_0 = arith.constant 0 : i32
    %c0_i32_1 = arith.constant 0 : i32
    return %c0_i32, %c0_i32_0 : i32, i32
  }
  func.func @transform_9(%arg0: i32) -> (i32, i32) {
    %c0_i32 = arith.constant 0 : i32
    %c0_i32_0 = arith.constant 0 : i32
    return %arg0, %c0_i32 : i32, i32
  }
}

</mosaic_0001>

<llo_original>
// kernel: tpu_custom_call.1
$region0: #{tpu_custom_call.1}
  #allocation0 [shape = 'u32[]', space=smem, size = 0x4, offset = 0x4, fixed_abs, tag = 'smem constant byte address 0x4 - core index']
  #allocation1 [shape = 'u32[72,128]{1,0:T(1,128)}', space=vmem, size = 0x9000, scoped, tag = 'internal scratch']
  %s0 = inlined_call_operand.hbm [shape: bf16[8,32], index: 0, kind: input, shape index: {}]
  %s1 = inlined_call_operand.hbm [shape: bf16[32,256], index: 1, kind: input, shape index: {}]
  %s2 = inlined_call_operand.hbm [shape: f32[1,256], index: 2, kind: input, shape index: {}]
  %s3 = inlined_call_operand.hbm [shape: bf16[256,256], index: 3, kind: input, shape index: {}]
  %s4 = inlined_call_operand.vmem [shape: f32[1,256], index: 4, kind: input, shape index: {}]
  %s5 = inlined_call_operand.hbm [shape: bf16[256,256], index: 5, kind: input, shape index: {}]
  %s6 = inlined_call_operand.vmem [shape: f32[1,256], index: 6, kind: input, shape index: {}]
  %s7 = inlined_call_operand.hbm [shape: bf16[256,1024], index: 7, kind: input, shape index: {}]
  %s8 = inlined_call_operand.hbm [shape: f32[1,1024], index: 8, kind: input, shape index: {}]
  %s9 = inlined_call_operand.hbm [shape: f32[8,1024], index: 9, kind: output, shape index: {}]
  %s10 = sld [smem:[#allocation0]]
  $region74: #{tpu_custom_call.1} parent=0
    _
  %s12 = ssub.s32 1, %s10
  %s13 = scalar_select 0, %s12, %s10
  $region1: #{tpu_custom_call.1} parent=0
    #allocation2 [shape = 'u8[2048]{0}', space=vmem, size = 0x800, scoped, tag = 'input window, operand 0, single buffered']
    #allocation3 [shape = 's32[1]{0}', space=sflag, size = 0x4, scoped, tag = 'scoped memory for tpu_custom_call.1']
    #allocation4 [shape = 's32[1]{0}', space=sflag, size = 0x4, scoped, tag = 'scoped memory for tpu_custom_call.1']
    #allocation5 [shape = 'u8[16384]{0}', space=vmem, size = 0x4000, scoped, tag = 'input window, operand 1, single buffered']
    #allocation6 [shape = 's32[1]{0}', space=sflag, size = 0x4, scoped, tag = 'scoped memory for tpu_custom_call.1']
    #allocation7 [shape = 'u8[1024]{0}', space=vmem, size = 0x400, scoped, tag = 'input window, operand 2, single buffered']
    #allocation8 [shape = 'u8[131072]{0}', space=vmem, size = 0x20000, scoped, tag = 'input window, operand 3, single buffered']
    #allocation9 [shape = 's32[1]{0}', space=sflag, size = 0x4, scoped, tag = 'scoped memory for tpu_custom_call.1']
    #allocation10 [shape = 'u8[131072]{0}', space=vmem, size = 0x20000, scoped, tag = 'input window, operand 5, single buffered']
    #allocation11 [shape = 'u8[524288]{0}', space=vmem, size = 0x80000, scoped, tag = 'input window, operand 7, single buffered']
    #allocation12 [shape = 's32[1]{0}', space=sflag, size = 0x4, scoped, tag = 'scoped memory for tpu_custom_call.1']
    #allocation13 [shape = 'u8[4096]{0}', space=vmem, size = 0x1000, scoped, tag = 'input window, operand 8, single buffered']
    #allocation14 [shape = 'u8[32768]{0}', space=vmem, size = 0x8000, scoped, tag = 'output window, operand 0, single buffered']
    %14 = vsyncpa [#allocation3], 0
    %15 = vsyncpa [#allocation6], 0
    %16 = vsyncpa [#allocation9], 0
    %17 = vsyncpa [#allocation12], 0
    %18 = vsyncpa [#allocation4], 0
    // Predicated region
    $region2: #{tpu_custom_call.1} parent=1 // pred_check
      _
    $region3: #{tpu_custom_call.1} parent=1 // pred_check_branch
      %20 = sbr.rel (0) target = $region5
    $region4: #{tpu_custom_call.1} parent=1 // pred_region
      %22 = vsyncadd [#allocation3], 0
      %s24 = sshll.u32 %s0, 4
      %s25 = int_to_ptr.hbm [resolvable:$true] %s24
      %s26 = sshll.u32 [#allocation2], 4
      %s27 = int_to_ptr.vmem [resolvable:$true] %s26
      %29 = dma.hbm_to_vmem [thread:$0]  %s25, 64, %s27, [#allocation3]
    $region5: #{tpu_custom_call.1} parent=1 // pred_fallthru
      _
    // Predicated region
    $region6: #{tpu_custom_call.1} parent=1 // pred_check
      _
    $region7: #{tpu_custom_call.1} parent=1 // pred_check_branch
      %31 = sbr.rel (0) target = $region9
    $region8: #{tpu_custom_call.1} parent=1 // pred_region
      %33 = vsyncadd [#allocation6], 0
      %s34 = sshll.u32 %s1, 4
      %s35 = int_to_ptr.hbm [resolvable:$true] %s34
      %s36 = sshll.u32 [#allocation5], 4
      %s37 = int_to_ptr.vmem [resolvable:$true] %s36
      %42 = dma.hbm_to_vmem [thread:$0]  %s35, 512, %s37, [#allocation6], 128, 128, 8
    $region9: #{tpu_custom_call.1} parent=1 // pred_fallthru
      _
    // Predicated region
    $region10: #{tpu_custom_call.1} parent=1 // pred_check
      _
    $region11: #{tpu_custom_call.1} parent=1 // pred_check_branch
      %44 = sbr.rel (0) target = $region13
    $region12: #{tpu_custom_call.1} parent=1 // pred_region
      %46 = vsyncadd [#allocation6], 0
      %s48 = sshll.u32 %s2, 4
      %s49 = int_to_ptr.hbm [resolvable:$true] %s48
      %s50 = sshll.u32 [#allocation7], 4
      %s51 = int_to_ptr.vmem [resolvable:$true] %s50
      %53 = dma.hbm_to_vmem [thread:$0]  %s49, 32, %s51, [#allocation6]
    $region13: #{tpu_custom_call.1} parent=1 // pred_fallthru
      _
    // Predicated region
    $region14: #{tpu_custom_call.1} parent=1 // pred_check
      _
    $region15: #{tpu_custom_call.1} parent=1 // pred_check_branch
      %55 = sbr.rel (0) target = $region17
    $region16: #{tpu_custom_call.1} parent=1 // pred_region
      %57 = vsyncadd [#allocation9], 0
      %s58 = sshll.u32 %s3, 4
      %s59 = int_to_ptr.hbm [resolvable:$true] %s58
      %s60 = sshll.u32 [#allocation8], 4
      %s61 = int_to_ptr.vmem [resolvable:$true] %s60
      %66 = dma.hbm_to_vmem [thread:$0]  %s59, 4096, %s61, [#allocation9], 128, 128, 8
    $region17: #{tpu_custom_call.1} parent=1 // pred_fallthru
      _
    // Predicated region
    $region18: #{tpu_custom_call.1} parent=1 // pred_check
      _
    $region19: #{tpu_custom_call.1} parent=1 // pred_check_branch
      %68 = sbr.rel (0) target = $region21
    $region20: #{tpu_custom_call.1} parent=1 // pred_region
      _
    $region21: #{tpu_custom_call.1} parent=1 // pred_fallthru
      _
    // Predicated region
    $region22: #{tpu_custom_call.1} parent=1 // pred_check
      _
    $region23: #{tpu_custom_call.1} parent=1 // pred_check_branch
      %70 = sbr.rel (0) target = $region25
    $region24: #{tpu_custom_call.1} parent=1 // pred_region
      %72 = vsyncadd [#allocation9], 0
      %s73 = sshll.u32 %s5, 4
      %s74 = int_to_ptr.hbm [resolvable:$true] %s73
      %s75 = sshll.u32 [#allocation10], 4
      %s76 = int_to_ptr.vmem [resolvable:$true] %s75
      %81 = dma.hbm_to_vmem [thread:$0]  %s74, 4096, %s76, [#allocation9], 128, 128, 8
    $region25: #{tpu_custom_call.1} parent=1 // pred_fallthru
      _
    // Predicated region
    $region26: #{tpu_custom_call.1} parent=1 // pred_check
      _
    $region27: #{tpu_custom_call.1} parent=1 // pred_check_branch
      %83 = sbr.rel (0) target = $region29
    $region28: #{tpu_custom_call.1} parent=1 // pred_region
      _
    $region29: #{tpu_custom_call.1} parent=1 // pred_fallthru
      _
    // Predicated region
    $region30: #{tpu_custom_call.1} parent=1 // pred_check
      _
    $region31: #{tpu_custom_call.1} parent=1 // pred_check_branch
      %85 = sbr.rel (0) target = $region33
    $region32: #{tpu_custom_call.1} parent=1 // pred_region
      %87 = vsyncadd [#allocation12], 0
      %s88 = sshll.u32 %s7, 4
      %s89 = int_to_ptr.hbm [resolvable:$true] %s88
      %s90 = sshll.u32 [#allocation11], 4
      %s91 = int_to_ptr.vmem [resolvable:$true] %s90
      %96 = dma.hbm_to_vmem [thread:$0]  %s89, 16384, %s91, [#allocation12], 512, 512, 32
    $region33: #{tpu_custom_call.1} parent=1 // pred_fallthru
      _
    // Predicated region
    $region34: #{tpu_custom_call.1} parent=1 // pred_check
      _
    $region35: #{tpu_custom_call.1} parent=1 // pred_check_branch
      %98 = sbr.rel (0) target = $region37
    $region36: #{tpu_custom_call.1} parent=1 // pred_region
      %100 = vsyncadd [#allocation12], 0
      %s102 = sshll.u32 %s8, 4
      %s103 = int_to_ptr.hbm [resolvable:$true] %s102
      %s104 = sshll.u32 [#allocation13], 4
      %s105 = int_to_ptr.vmem [resolvable:$true] %s104
      %107 = dma.hbm_to_vmem [thread:$0]  %s103, 128, %s105, [#allocation12]
    $region37: #{tpu_custom_call.1} parent=1 // pred_fallthru
      _
    // Predicated region
    $region38: #{tpu_custom_call.1} parent=1 // pred_check
      _
    $region39: #{tpu_custom_call.1} parent=1 // pred_check_branch
      %109 = sbr.rel (0) target = $region41
    $region40: #{tpu_custom_call.1} parent=1 // pred_region
      %111 = dma.done [#allocation3], 64
    $region41: #{tpu_custom_call.1} parent=1 // pred_fallthru
      _
    // Predicated region
    $region42: #{tpu_custom_call.1} parent=1 // pred_check
      _
    $region43: #{tpu_custom_call.1} parent=1 // pred_check_branch
      %113 = sbr.rel (0) target = $region45
    $region44: #{tpu_custom_call.1} parent=1 // pred_region
      %115 = dma.done [#allocation6], 512
    $region45: #{tpu_custom_call.1} parent=1 // pred_fallthru
      _
    // Predicated region
    $region46: #{tpu_custom_call.1} parent=1 // pred_check
      _
    $region47: #{tpu_custom_call.1} parent=1 // pred_check_branch
      %117 = sbr.rel (0) target = $region49
    $region48: #{tpu_custom_call.1} parent=1 // pred_region
      %119 = dma.done [#allocation6], 32
    $region49: #{tpu_custom_call.1} parent=1 // pred_fallthru
      _
    // Predicated region
    $region50: #{tpu_custom_call.1} parent=1 // pred_check
      _
    $region51: #{tpu_custom_call.1} parent=1 // pred_check_branch
      %121 = sbr.rel (0) target = $region53
    $region52: #{tpu_custom_call.1} parent=1 // pred_region
      %123 = dma.done [#allocation9], 4096
    $region53: #{tpu_custom_call.1} parent=1 // pred_fallthru
      _
    // Predicated region
    $region54: #{tpu_custom_call.1} parent=1 // pred_check
      _
    $region55: #{tpu_custom_call.1} parent=1 // pred_check_branch
      %125 = sbr.rel (0) target = $region57
    $region56: #{tpu_custom_call.1} parent=1 // pred_region
      %127 = dma.done [#allocation9], 4096
    $region57: #{tpu_custom_call.1} parent=1 // pred_fallthru
      _
    // Predicated region
    $region58: #{tpu_custom_call.1} parent=1 // pred_check
      _
    $region59: #{tpu_custom_call.1} parent=1 // pred_check_branch
      %129 = sbr.rel (0) target = $region61
    $region60: #{tpu_custom_call.1} parent=1 // pred_region
      %131 = dma.done [#allocation12], 16384
    $region61: #{tpu_custom_call.1} parent=1 // pred_fallthru
      _
    // Predicated region
    $region62: #{tpu_custom_call.1} parent=1 // pred_check
      _
    $region63: #{tpu_custom_call.1} parent=1 // pred_check_branch
      %133 = sbr.rel (0) target = $region65
    $region64: #{tpu_custom_call.1} parent=1 // pred_region
      %135 = dma.done [#allocation12], 128
    $region65: #{tpu_custom_call.1} parent=1 // pred_fallthru
      _
    %v137 = vld [vmem:[#allocation2] sm:$0xf]
    %v138 = vld [vmem:[#allocation5] sm:$0xff]
    %v139 = vld [vmem:[#allocation5 + $0x8] sm:$0xff]
    %v140 = vld [vmem:[#allocation5 + $0x10] sm:$0xff]
    %v141 = vld [vmem:[#allocation5 + $0x18] sm:$0xff]
    %v142 = vld [vmem:[#allocation7] sm:$0x3]
    %v144 = vperm.slane %v142, 0
    %v145 = vperm.slane %v142, 1
    %v152 = vunpack.c.l.b16 %v138
    %v153 = vunpack.c.h.b16 %v138
    %v154 = vunpack.c.l.b16 %v139
    %v155 = vunpack.c.h.b16 %v139
    %v156 = vunpack.c.l.b16 %v140
    %v157 = vunpack.c.h.b16 %v140
    %v158 = vunpack.c.l.b16 %v141
    %v159 = vunpack.c.h.b16 %v141
    %v160 = vpack.c.b16 %v154, %v152
    %v161 = vpack.c.b16 %v155, %v153
    %v162 = vpack.c.b16 %v158, %v156
    %v163 = vpack.c.b16 %v159, %v157
    %vm168 = vcmask 261120
    %v170 = vsel %vm168, %v137, 0
    %172 = vmatpush.bf16.msra.mxu0 0
    %173 = vmatpush.bf16.msra.mxu0 0
    %174 = vmatpush.bf16.msra.mxu0 0
    %175 = vmatpush.bf16.msra.mxu0 0
    %176 = vmatpush.bf16.msra.mxu0 0
    %177 = vmatpush.bf16.msra.mxu0 0
    %178 = vmatpush.bf16.msra.mxu0 %v162
    %179 = vmatpush.bf16.msra.mxu0 %v160
    %180 = vmatmul.bf16.gmra.mxu0 %v170
    %v181 = vpop.f32.mrf.mxu0
    %v182 = vadd.f32 %v144, %v181
    %v183 = vpop.f32.mrf.mxu0
    %184 = vdwg.mxu0
    %185 = vmatpush.bf16.msra.mxu0 0
    %186 = vmatpush.bf16.msra.mxu0 0
    %187 = vmatpush.bf16.msra.mxu0 0
    %188 = vmatpush.bf16.msra.mxu0 0
    %189 = vmatpush.bf16.msra.mxu0 0
    %190 = vmatpush.bf16.msra.mxu0 0
    %191 = vmatpush.bf16.msra.mxu0 %v163
    %192 = vmatpush.bf16.msra.mxu0 %v161
    %193 = vmatmul.bf16.gmra.mxu0 %v170
    %v194 = vpop.f32.mrf.mxu0
    %v195 = vadd.f32 %v145, %v194
    %v196 = vpop.f32.mrf.mxu0
    %197 = vdwg.mxu0
    %v198 = vsub.f32 0.0, %v182
    %v199 = vsub.f32 0.0, %v195
    %v200 = vmul.f32 %v198, 1.442695
    %v201 = vpow.pop %v200
    %v202 = vmul.f32 %v199, 1.442695
    %v203 = vpow.pop %v202
    %v204 = vadd.f32 %v201, 1.0
    %v205 = vadd.f32 %v203, 1.0
    %v206 = vrcp.pop %v204
    %v207 = vmul.f32 %v204, %v206
    %v208 = vsub.f32 1.0, %v207
    %v209 = vmul.f32 %v206, %v208
    %v210 = vadd.f32 %v206, %v209
    %vm211 = vweird.f32 %v204
    %vm212 = vweird.f32 %v206
    %vm213 = vmor %vm211, %vm212
    %v214 = vsel %vm213, %v206, %v210
    %v215 = vand.u32 2147483647, %v204
    %vm216 = vcmp.eq.f32.partialorder %v215, 8.507059e+37
    %v217 = vand.u32 %v204, 2147483648
    %v218 = vor.u32 1.1754944e-38, %v217
    %v219 = vsel %vm216, %v218, %v214
    %v220 = vmul.f32 1.0, %v219
    %v221 = vrcp.pop %v205
    %v222 = vmul.f32 %v205, %v221
    %v223 = vsub.f32 1.0, %v222
    %v224 = vmul.f32 %v221, %v223
    %v225 = vadd.f32 %v221, %v224
    %vm226 = vweird.f32 %v205
    %vm227 = vweird.f32 %v221
    %vm228 = vmor %vm226, %vm227
    %v229 = vsel %vm228, %v221, %v225
    %v230 = vand.u32 2147483647, %v205
    %vm231 = vcmp.eq.f32.partialorder %v230, 8.507059e+37
    %v232 = vand.u32 %v205, 2147483648
    %v233 = vor.u32 1.1754944e-38, %v232
    %v234 = vsel %vm231, %v233, %v229
    %v235 = vmul.f32 1.0, %v234
    %v236 = vmul.f32 %v182, %v220
    %v237 = vmul.f32 %v195, %v235
    %v238 = vpack.c.bf16 %v236, %v236
    %v239 = vpack.c.bf16 %v237, %v237
    %v240 = vld [vmem:[#allocation8] sm:$0xff]
    %v241 = vld [vmem:[#allocation8 + $0x8] sm:$0xff]
    %v242 = vld [vmem:[#allocation8 + $0x10] sm:$0xff]
    %v243 = vld [vmem:[#allocation8 + $0x18] sm:$0xff]
    %v244 = vld [vmem:[#allocation8 + $0x20] sm:$0xff]
    %v245 = vld [vmem:[#allocation8 + $0x28] sm:$0xff]
    %v246 = vld [vmem:[#allocation8 + $0x30] sm:$0xff]
    %v247 = vld [vmem:[#allocation8 + $0x38] sm:$0xff]
    %v248 = vld [vmem:[#allocation8 + $0x40] sm:$0xff]
    %v249 = vld [vmem:[#allocation8 + $0x48] sm:$0xff]
    %v250 = vld [vmem:[#allocation8 + $0x50] sm:$0xff]
    %v251 = vld [vmem:[#allocation8 + $0x58] sm:$0xff]
    %v252 = vld [vmem:[#allocation8 + $0x60] sm:$0xff]
    %v253 = vld [vmem:[#allocation8 + $0x68] sm:$0xff]
    %v254 = vld [vmem:[#allocation8 + $0x70] sm:$0xff]
    %v255 = vld [vmem:[#allocation8 + $0x78] sm:$0xff]
    %v256 = vld [vmem:[#allocation8 + $0x80] sm:$0xff]
    %v257 = vld [vmem:[#allocation8 + $0x88] sm:$0xff]
    %v258 = vld [vmem:[#allocation8 + $0x90] sm:$0xff]
    %v259 = vld [vmem:[#allocation8 + $0x98] sm:$0xff]
    %v260 = vld [vmem:[#allocation8 + $0xa0] sm:$0xff]
    %v261 = vld [vmem:[#allocation8 + $0xa8] sm:$0xff]
    %v262 = vld [vmem:[#allocation8 + $0xb0] sm:$0xff]
    %v263 = vld [vmem:[#allocation8 + $0xb8] sm:$0xff]
    %v264 = vld [vmem:[#allocation8 + $0xc0] sm:$0xff]
    %v265 = vld [vmem:[#allocation8 + $0xc8] sm:$0xff]
    %v266 = vld [vmem:[#allocation8 + $0xd0] sm:$0xff]
    %v267 = vld [vmem:[#allocation8 + $0xd8] sm:$0xff]
    %v268 = vld [vmem:[#allocation8 + $0xe0] sm:$0xff]
    %v269 = vld [vmem:[#allocation8 + $0xe8] sm:$0xff]
    %v270 = vld [vmem:[#allocation8 + $0xf0] sm:$0xff]
    %v271 = vld [vmem:[#allocation8 + $0xf8] sm:$0xff]
    %v272 = vld [vmem:[%s4] sm:$0x3]
    %v274 = vperm.slane %v272, 0
    %v275 = vperm.slane %v272, 1
    %v310 = vunpack.c.l.b16 %v240
    %v311 = vunpack.c.h.b16 %v240
    %v312 = vunpack.c.l.b16 %v241
    %v313 = vunpack.c.h.b16 %v241
    %v314 = vunpack.c.l.b16 %v242
    %v315 = vunpack.c.h.b16 %v242
    %v316 = vunpack.c.l.b16 %v243
    %v317 = vunpack.c.h.b16 %v243
    %v318 = vunpack.c.l.b16 %v244
    %v319 = vunpack.c.h.b16 %v244
    %v320 = vunpack.c.l.b16 %v245
    %v321 = vunpack.c.h.b16 %v245
    %v322 = vunpack.c.l.b16 %v246
    %v323 = vunpack.c.h.b16 %v246
    %v324 = vunpack.c.l.b16 %v247
    %v325 = vunpack.c.h.b16 %v247
    %v326 = vunpack.c.l.b16 %v248
    %v327 = vunpack.c.h.b16 %v248
    %v328 = vunpack.c.l.b16 %v249
    %v329 = vunpack.c.h.b16 %v249
    %v330 = vunpack.c.l.b16 %v250
    %v331 = vunpack.c.h.b16 %v250
    %v332 = vunpack.c.l.b16 %v251
    %v333 = vunpack.c.h.b16 %v251
    %v334 = vunpack.c.l.b16 %v252
    %v335 = vunpack.c.h.b16 %v252
    %v336 = vunpack.c.l.b16 %v253
    %v337 = vunpack.c.h.b16 %v253
    %v338 = vunpack.c.l.b16 %v254
    %v339 = vunpack.c.h.b16 %v254
    %v340 = vunpack.c.l.b16 %v255
    %v341 = vunpack.c.h.b16 %v255
    %v342 = vunpack.c.l.b16 %v256
    %v343 = vunpack.c.h.b16 %v256
    %v344 = vunpack.c.l.b16 %v257
    %v345 = vunpack.c.h.b16 %v257
    %v346 = vunpack.c.l.b16 %v258
    %v347 = vunpack.c.h.b16 %v258
    %v348 = vunpack.c.l.b16 %v259
    %v349 = vunpack.c.h.b16 %v259
    %v350 = vunpack.c.l.b16 %v260
    %v351 = vunpack.c.h.b16 %v260
    %v352 = vunpack.c.l.b16 %v261
    %v353 = vunpack.c.h.b16 %v261
    %v354 = vunpack.c.l.b16 %v262
    %v355 = vunpack.c.h.b16 %v262
    %v356 = vunpack.c.l.b16 %v263
    %v357 = vunpack.c.h.b16 %v263
    %v358 = vunpack.c.l.b16 %v264
    %v359 = vunpack.c.h.b16 %v264
    %v360 = vunpack.c.l.b16 %v265
    %v361 = vunpack.c.h.b16 %v265
    %v362 = vunpack.c.l.b16 %v266
    %v363 = vunpack.c.h.b16 %v266
    %v364 = vunpack.c.l.b16 %v267
    %v365 = vunpack.c.h.b16 %v267
    %v366 = vunpack.c.l.b16 %v268
    %v367 = vunpack.c.h.b16 %v268
    %v368 = vunpack.c.l.b16 %v269
    %v369 = vunpack.c.h.b16 %v269
    %v370 = vunpack.c.l.b16 %v270
    %v371 = vunpack.c.h.b16 %v270
    %v372 = vunpack.c.l.b16 %v271
    %v373 = vunpack.c.h.b16 %v271
    %v374 = vpack.c.b16 %v312, %v310
    %v375 = vpack.c.b16 %v313, %v311
    %v376 = vpack.c.b16 %v316, %v314
    %v377 = vpack.c.b16 %v317, %v315
    %v378 = vpack.c.b16 %v320, %v318
    %v379 = vpack.c.b16 %v321, %v319
    %v380 = vpack.c.b16 %v324, %v322
    %v381 = vpack.c.b16 %v325, %v323
    %v382 = vpack.c.b16 %v328, %v326
    %v383 = vpack.c.b16 %v329, %v327
    %v384 = vpack.c.b16 %v332, %v330
    %v385 = vpack.c.b16 %v333, %v331
    %v386 = vpack.c.b16 %v336, %v334
    %v387 = vpack.c.b16 %v337, %v335
    %v388 = vpack.c.b16 %v340, %v338
    %v389 = vpack.c.b16 %v341, %v339
    %v390 = vpack.c.b16 %v344, %v342
    %v391 = vpack.c.b16 %v345, %v343
    %v392 = vpack.c.b16 %v348, %v346
    %v393 = vpack.c.b16 %v349, %v347
    %v394 = vpack.c.b16 %v352, %v350
    %v395 = vpack.c.b16 %v353, %v351
    %v396 = vpack.c.b16 %v356, %v354
    %v397 = vpack.c.b16 %v357, %v355
    %v398 = vpack.c.b16 %v360, %v358
    %v399 = vpack.c.b16 %v361, %v359
    %v400 = vpack.c.b16 %v364, %v362
    %v401 = vpack.c.b16 %v365, %v363
    %v402 = vpack.c.b16 %v368, %v366
    %v403 = vpack.c.b16 %v369, %v367
    %v404 = vpack.c.b16 %v372, %v370
    %v405 = vpack.c.b16 %v373, %v371
    %438 = vmatpush.bf16.msra.mxu0 %v388
    %439 = vmatpush.bf16.msra.mxu0 %v386
    %440 = vmatpush.bf16.msra.mxu0 %v384
    %441 = vmatpush.bf16.msra.mxu0 %v382
    %442 = vmatpush.bf16.msra.mxu0 %v380
    %443 = vmatpush.bf16.msra.mxu0 %v378
    %444 = vmatpush.bf16.msra.mxu0 %v376
    %445 = vmatpush.bf16.msra.mxu0 %v374
    %446 = vmatmul.bf16.gmra.mxu0 %v238
    %v447 = vpop.f32.mrf.mxu0
    %v448 = vadd.f32 %v274, %v447
    %v449 = vpop.f32.mrf.mxu0
    %450 = vdwg.mxu0
    %451 = vmatpush.bf16.msra.mxu0 %v404
    %452 = vmatpush.bf16.msra.mxu0 %v402
    %453 = vmatpush.bf16.msra.mxu0 %v400
    %454 = vmatpush.bf16.msra.mxu0 %v398
    %455 = vmatpush.bf16.msra.mxu0 %v396
    %456 = vmatpush.bf16.msra.mxu0 %v394
    %457 = vmatpush.bf16.msra.mxu0 %v392
    %458 = vmatpush.bf16.msra.mxu0 %v390
    %459 = vmatmul.bf16.gmra.mxu0 %v239
    %v460 = vpop.f32.mrf.mxu0
    %v461 = vadd.f32 %v448, %v460
    %v462 = vpop.f32.mrf.mxu0
    %463 = vdwg.mxu0
    %464 = vmatpush.bf16.msra.mxu0 %v389
    %465 = vmatpush.bf16.msra.mxu0 %v387
    %466 = vmatpush.bf16.msra.mxu0 %v385
    %467 = vmatpush.bf16.msra.mxu0 %v383
    %468 = vmatpush.bf16.msra.mxu0 %v381
    %469 = vmatpush.bf16.msra.mxu0 %v379
    %470 = vmatpush.bf16.msra.mxu0 %v377
    %471 = vmatpush.bf16.msra.mxu0 %v375
    %472 = vmatmul.bf16.gmra.mxu0 %v238
    %v473 = vpop.f32.mrf.mxu0
    %v474 = vadd.f32 %v275, %v473
    %v475 = vpop.f32.mrf.mxu0
    %476 = vdwg.mxu0
    %477 = vmatpush.bf16.msra.mxu0 %v405
    %478 = vmatpush.bf16.msra.mxu0 %v403
    %479 = vmatpush.bf16.msra.mxu0 %v401
    %480 = vmatpush.bf16.msra.mxu0 %v399
    %481 = vmatpush.bf16.msra.mxu0 %v397
    %482 = vmatpush.bf16.msra.mxu0 %v395
    %483 = vmatpush.bf16.msra.mxu0 %v393
    %484 = vmatpush.bf16.msra.mxu0 %v391
    %485 = vmatmul.bf16.gmra.mxu0 %v239
    %v486 = vpop.f32.mrf.mxu0
    %v487 = vadd.f32 %v474, %v486
    %v488 = vpop.f32.mrf.mxu0
    %489 = vdwg.mxu0
    %v490 = vsub.f32 0.0, %v461
    %v491 = vsub.f32 0.0, %v487
    %v492 = vmul.f32 %v490, 1.442695
    %v493 = vpow.pop %v492
    %v494 = vmul.f32 %v491, 1.442695
    %v495 = vpow.pop %v494
    %v496 = vadd.f32 %v493, 1.0
    %v497 = vadd.f32 %v495, 1.0
    %v498 = vrcp.pop %v496
    %v499 = vmul.f32 %v496, %v498
    %v500 = vsub.f32 1.0, %v499
    %v501 = vmul.f32 %v498, %v500
    %v502 = vadd.f32 %v498, %v501
    %vm503 = vweird.f32 %v496
    %vm504 = vweird.f32 %v498
    %vm505 = vmor %vm503, %vm504
    %v506 = vsel %vm505, %v498, %v502
    %v507 = vand.u32 2147483647, %v496
    %vm508 = vcmp.eq.f32.partialorder %v507, 8.507059e+37
    %v509 = vand.u32 %v496, 2147483648
    %v510 = vor.u32 1.1754944e-38, %v509
    %v511 = vsel %vm508, %v510, %v506
    %v512 = vmul.f32 1.0, %v511
    %v513 = vrcp.pop %v497
    %v514 = vmul.f32 %v497, %v513
    %v515 = vsub.f32 1.0, %v514
    %v516 = vmul.f32 %v513, %v515
    %v517 = vadd.f32 %v513, %v516
    %vm518 = vweird.f32 %v497
    %vm519 = vweird.f32 %v513
    %vm520 = vmor %vm518, %vm519
    %v521 = vsel %vm520, %v513, %v517
    %v522 = vand.u32 2147483647, %v497
    %vm523 = vcmp.eq.f32.partialorder %v522, 8.507059e+37
    %v524 = vand.u32 %v497, 2147483648
    %v525 = vor.u32 1.1754944e-38, %v524
    %v526 = vsel %vm523, %v525, %v521
    %v527 = vmul.f32 1.0, %v526
    %v528 = vmul.f32 %v461, %v512
    %v529 = vmul.f32 %v487, %v527
    %v530 = vpack.c.bf16 %v528, %v528
    %v531 = vpack.c.bf16 %v529, %v529
    %v532 = vld [vmem:[#allocation10] sm:$0xff]
    %v533 = vld [vmem:[#allocation10 + $0x8] sm:$0xff]
    %v534 = vld [vmem:[#allocation10 + $0x10] sm:$0xff]
    %v535 = vld [vmem:[#allocation10 + $0x18] sm:$0xff]
    %v536 = vld [vmem:[#allocation10 + $0x20] sm:$0xff]
    %v537 = vld [vmem:[#allocation10 + $0x28] sm:$0xff]
    %v538 = vld [vmem:[#allocation10 + $0x30] sm:$0xff]
    %v539 = vld [vmem:[#allocation10 + $0x38] sm:$0xff]
    %v540 = vld [vmem:[#allocation10 + $0x40] sm:$0xff]
    %v541 = vld [vmem:[#allocation10 + $0x48] sm:$0xff]
    %v542 = vld [vmem:[#allocation10 + $0x50] sm:$0xff]
    %v543 = vld [vmem:[#allocation10 + $0x58] sm:$0xff]
    %v544 = vld [vmem:[#allocation10 + $0x60] sm:$0xff]
    %v545 = vld [vmem:[#allocation10 + $0x68] sm:$0xff]
    %v546 = vld [vmem:[#allocation10 + $0x70] sm:$0xff]
    %v547 = vld [vmem:[#allocation10 + $0x78] sm:$0xff]
    %v548 = vld [vmem:[#allocation10 + $0x80] sm:$0xff]
    %v549 = vld [vmem:[#allocation10 + $0x88] sm:$0xff]
    %v550 = vld [vmem:[#allocation10 + $0x90] sm:$0xff]
    %v551 = vld [vmem:[#allocation10 + $0x98] sm:$0xff]
    %v552 = vld [vmem:[#allocation10 + $0xa0] sm:$0xff]
    %v553 = vld [vmem:[#allocation10 + $0xa8] sm:$0xff]
    %v554 = vld [vmem:[#allocation10 + $0xb0] sm:$0xff]
    %v555 = vld [vmem:[#allocation10 + $0xb8] sm:$0xff]
    %v556 = vld [vmem:[#allocation10 + $0xc0] sm:$0xff]
    %v557 = vld [vmem:[#allocation10 + $0xc8] sm:$0xff]
    %v558 = vld [vmem:[#allocation10 + $0xd0] sm:$0xff]
    %v559 = vld [vmem:[#allocation10 + $0xd8] sm:$0xff]
    %v560 = vld [vmem:[#allocation10 + $0xe0] sm:$0xff]
    %v561 = vld [vmem:[#allocation10 + $0xe8] sm:$0xff]
    %v562 = vld [vmem:[#allocation10 + $0xf0] sm:$0xff]
    %v563 = vld [vmem:[#allocation10 + $0xf8] sm:$0xff]
    %v564 = vld [vmem:[%s6] sm:$0x3]
    %v566 = vperm.slane %v564, 0
    %v567 = vperm.slane %v564, 1
    %v602 = vunpack.c.l.b16 %v532
    %v603 = vunpack.c.h.b16 %v532
    %v604 = vunpack.c.l.b16 %v533
    %v605 = vunpack.c.h.b16 %v533
    %v606 = vunpack.c.l.b16 %v534
    %v607 = vunpack.c.h.b16 %v534
    %v608 = vunpack.c.l.b16 %v535
    %v609 = vunpack.c.h.b16 %v535
    %v610 = vunpack.c.l.b16 %v536
    %v611 = vunpack.c.h.b16 %v536
    %v612 = vunpack.c.l.b16 %v537
    %v613 = vunpack.c.h.b16 %v537
    %v614 = vunpack.c.l.b16 %v538
    %v615 = vunpack.c.h.b16 %v538
    %v616 = vunpack.c.l.b16 %v539
    %v617 = vunpack.c.h.b16 %v539
    %v618 = vunpack.c.l.b16 %v540
    %v619 = vunpack.c.h.b16 %v540
    %v620 = vunpack.c.l.b16 %v541
    %v621 = vunpack.c.h.b16 %v541
    %v622 = vunpack.c.l.b16 %v542
    %v623 = vunpack.c.h.b16 %v542
    %v624 = vunpack.c.l.b16 %v543
    %v625 = vunpack.c.h.b16 %v543
    %v626 = vunpack.c.l.b16 %v544
    %v627 = vunpack.c.h.b16 %v544
    %v628 = vunpack.c.l.b16 %v545
    %v629 = vunpack.c.h.b16 %v545
    %v630 = vunpack.c.l.b16 %v546
    %v631 = vunpack.c.h.b16 %v546
    %v632 = vunpack.c.l.b16 %v547
    %v633 = vunpack.c.h.b16 %v547
    %v634 = vunpack.c.l.b16 %v548
    %v635 = vunpack.c.h.b16 %v548
    %v636 = vunpack.c.l.b16 %v549
    %v637 = vunpack.c.h.b16 %v549
    %v638 = vunpack.c.l.b16 %v550
    %v639 = vunpack.c.h.b16 %v550
    %v640 = vunpack.c.l.b16 %v551
    %v641 = vunpack.c.h.b16 %v551
    %v642 = vunpack.c.l.b16 %v552
    %v643 = vunpack.c.h.b16 %v552
    %v644 = vunpack.c.l.b16 %v553
    %v645 = vunpack.c.h.b16 %v553
    %v646 = vunpack.c.l.b16 %v554
    %v647 = vunpack.c.h.b16 %v554
    %v648 = vunpack.c.l.b16 %v555
    %v649 = vunpack.c.h.b16 %v555
    %v650 = vunpack.c.l.b16 %v556
    %v651 = vunpack.c.h.b16 %v556
    %v652 = vunpack.c.l.b16 %v557
    %v653 = vunpack.c.h.b16 %v557
    %v654 = vunpack.c.l.b16 %v558
    %v655 = vunpack.c.h.b16 %v558
    %v656 = vunpack.c.l.b16 %v559
    %v657 = vunpack.c.h.b16 %v559
    %v658 = vunpack.c.l.b16 %v560
    %v659 = vunpack.c.h.b16 %v560
    %v660 = vunpack.c.l.b16 %v561
    %v661 = vunpack.c.h.b16 %v561
    %v662 = vunpack.c.l.b16 %v562
    %v663 = vunpack.c.h.b16 %v562
    %v664 = vunpack.c.l.b16 %v563
    %v665 = vunpack.c.h.b16 %v563
    %v666 = vpack.c.b16 %v604, %v602
    %v667 = vpack.c.b16 %v605, %v603
    %v668 = vpack.c.b16 %v608, %v606
    %v669 = vpack.c.b16 %v609, %v607
    %v670 = vpack.c.b16 %v612, %v610
    %v671 = vpack.c.b16 %v613, %v611
    %v672 = vpack.c.b16 %v616, %v614
    %v673 = vpack.c.b16 %v617, %v615
    %v674 = vpack.c.b16 %v620, %v618
    %v675 = vpack.c.b16 %v621, %v619
    %v676 = vpack.c.b16 %v624, %v622
    %v677 = vpack.c.b16 %v625, %v623
    %v678 = vpack.c.b16 %v628, %v626
    %v679 = vpack.c.b16 %v629, %v627
    %v680 = vpack.c.b16 %v632, %v630
    %v681 = vpack.c.b16 %v633, %v631
    %v682 = vpack.c.b16 %v636, %v634
    %v683 = vpack.c.b16 %v637, %v635
    %v684 = vpack.c.b16 %v640, %v638
    %v685 = vpack.c.b16 %v641, %v639
    %v686 = vpack.c.b16 %v644, %v642
    %v687 = vpack.c.b16 %v645, %v643
    %v688 = vpack.c.b16 %v648, %v646
    %v689 = vpack.c.b16 %v649, %v647
    %v690 = vpack.c.b16 %v652, %v650
    %v691 = vpack.c.b16 %v653, %v651
    %v692 = vpack.c.b16 %v656, %v654
    %v693 = vpack.c.b16 %v657, %v655
    %v694 = vpack.c.b16 %v660, %v658
    %v695 = vpack.c.b16 %v661, %v659
    %v696 = vpack.c.b16 %v664, %v662
    %v697 = vpack.c.b16 %v665, %v663
    %730 = vmatpush.bf16.msra.mxu0 %v680
    %731 = vmatpush.bf16.msra.mxu0 %v678
    %732 = vmatpush.bf16.msra.mxu0 %v676
    %733 = vmatpush.bf16.msra.mxu0 %v674
    %734 = vmatpush.bf16.msra.mxu0 %v672
    %735 = vmatpush.bf16.msra.mxu0 %v670
    %736 = vmatpush.bf16.msra.mxu0 %v668
    %737 = vmatpush.bf16.msra.mxu0 %v666
    %738 = vmatmul.bf16.gmra.mxu0 %v530
    %v739 = vpop.f32.mrf.mxu0
    %v740 = vadd.f32 %v566, %v739
    %v741 = vpop.f32.mrf.mxu0
    %742 = vdwg.mxu0
    %743 = vmatpush.bf16.msra.mxu0 %v696
    %744 = vmatpush.bf16.msra.mxu0 %v694
    %745 = vmatpush.bf16.msra.mxu0 %v692
    %746 = vmatpush.bf16.msra.mxu0 %v690
    %747 = vmatpush.bf16.msra.mxu0 %v688
    %748 = vmatpush.bf16.msra.mxu0 %v686
    %749 = vmatpush.bf16.msra.mxu0 %v684
    %750 = vmatpush.bf16.msra.mxu0 %v682
    %751 = vmatmul.bf16.gmra.mxu0 %v531
    %v752 = vpop.f32.mrf.mxu0
    %v753 = vadd.f32 %v740, %v752
    %v754 = vpop.f32.mrf.mxu0
    %755 = vdwg.mxu0
    %756 = vmatpush.bf16.msra.mxu0 %v681
    %757 = vmatpush.bf16.msra.mxu0 %v679
    %758 = vmatpush.bf16.msra.mxu0 %v677
    %759 = vmatpush.bf16.msra.mxu0 %v675
    %760 = vmatpush.bf16.msra.mxu0 %v673
    %761 = vmatpush.bf16.msra.mxu0 %v671
    %762 = vmatpush.bf16.msra.mxu0 %v669
    %763 = vmatpush.bf16.msra.mxu0 %v667
    %764 = vmatmul.bf16.gmra.mxu0 %v530
    %v765 = vpop.f32.mrf.mxu0
    %v766 = vadd.f32 %v567, %v765
    %v767 = vpop.f32.mrf.mxu0
    %768 = vdwg.mxu0
    %769 = vmatpush.bf16.msra.mxu0 %v697
    %770 = vmatpush.bf16.msra.mxu0 %v695
    %771 = vmatpush.bf16.msra.mxu0 %v693
    %772 = vmatpush.bf16.msra.mxu0 %v691
    %773 = vmatpush.bf16.msra.mxu0 %v689
    %774 = vmatpush.bf16.msra.mxu0 %v687
    %775 = vmatpush.bf16.msra.mxu0 %v685
    %776 = vmatpush.bf16.msra.mxu0 %v683
    %777 = vmatmul.bf16.gmra.mxu0 %v531
    %v778 = vpop.f32.mrf.mxu0
    %v779 = vadd.f32 %v766, %v778
    %v780 = vpop.f32.mrf.mxu0
    %781 = vdwg.mxu0
    %v782 = vsub.f32 0.0, %v753
    %v783 = vsub.f32 0.0, %v779
    %v784 = vmul.f32 %v782, 1.442695
    %v785 = vpow.pop %v784
    %v786 = vmul.f32 %v783, 1.442695
    %v787 = vpow.pop %v786
    %v788 = vadd.f32 %v785, 1.0
    %v789 = vadd.f32 %v787, 1.0
    %v790 = vrcp.pop %v788
    %v791 = vmul.f32 %v788, %v790
    %v792 = vsub.f32 1.0, %v791
    %v793 = vmul.f32 %v790, %v792
    %v794 = vadd.f32 %v790, %v793
    %vm795 = vweird.f32 %v788
    %vm796 = vweird.f32 %v790
    %vm797 = vmor %vm795, %vm796
    %v798 = vsel %vm797, %v790, %v794
    %v799 = vand.u32 2147483647, %v788
    %vm800 = vcmp.eq.f32.partialorder %v799, 8.507059e+37
    %v801 = vand.u32 %v788, 2147483648
    %v802 = vor.u32 1.1754944e-38, %v801
    %v803 = vsel %vm800, %v802, %v798
    %v804 = vmul.f32 1.0, %v803
    %v805 = vrcp.pop %v789
    %v806 = vmul.f32 %v789, %v805
    %v807 = vsub.f32 1.0, %v806
    %v808 = vmul.f32 %v805, %v807
    %v809 = vadd.f32 %v805, %v808
    %vm810 = vweird.f32 %v789
    %vm811 = vweird.f32 %v805
    %vm812 = vmor %vm810, %vm811
    %v813 = vsel %vm812, %v805, %v809
    %v814 = vand.u32 2147483647, %v789
    %vm815 = vcmp.eq.f32.partialorder %v814, 8.507059e+37
    %v816 = vand.u32 %v789, 2147483648
    %v817 = vor.u32 1.1754944e-38, %v816
    %v818 = vsel %vm815, %v817, %v813
    %v819 = vmul.f32 1.0, %v818
    %v820 = vmul.f32 %v753, %v804
    %v821 = vmul.f32 %v779, %v819
    %v822 = vpack.c.bf16 %v820, %v820
    %v823 = vpack.c.bf16 %v821, %v821
    %v824 = vld [vmem:[#allocation11] sm:$0xff]
    %v825 = vld [vmem:[#allocation11 + $0x8] sm:$0xff]
    %v826 = vld [vmem:[#allocation11 + $0x10] sm:$0xff]
    %v827 = vld [vmem:[#allocation11 + $0x18] sm:$0xff]
    %v828 = vld [vmem:[#allocation11 + $0x20] sm:$0xff]
    %v829 = vld [vmem:[#allocation11 + $0x28] sm:$0xff]
    %v830 = vld [vmem:[#allocation11 + $0x30] sm:$0xff]
    %v831 = vld [vmem:[#allocation11 + $0x38] sm:$0xff]
    %v832 = vld [vmem:[#allocation11 + $0x40] sm:$0xff]
    %v833 = vld [vmem:[#allocation11 + $0x48] sm:$0xff]
    %v834 = vld [vmem:[#allocation11 + $0x50] sm:$0xff]
    %v835 = vld [vmem:[#allocation11 + $0x58] sm:$0xff]
    %v836 = vld [vmem:[#allocation11 + $0x60] sm:$0xff]
    %v837 = vld [vmem:[#allocation11 + $0x68] sm:$0xff]
    %v838 = vld [vmem:[#allocation11 + $0x70] sm:$0xff]
    %v839 = vld [vmem:[#allocation11 + $0x78] sm:$0xff]
    %v840 = vld [vmem:[#allocation11 + $0x80] sm:$0xff]
    %v841 = vld [vmem:[#allocation11 + $0x88] sm:$0xff]
    %v842 = vld [vmem:[#allocation11 + $0x90] sm:$0xff]
    %v843 = vld [vmem:[#allocation11 + $0x98] sm:$0xff]
    %v844 = vld [vmem:[#allocation11 + $0xa0] sm:$0xff]
    %v845 = vld [vmem:[#allocation11 + $0xa8] sm:$0xff]
    %v846 = vld [vmem:[#allocation11 + $0xb0] sm:$0xff]
    %v847 = vld [vmem:[#allocation11 + $0xb8] sm:$0xff]
    %v848 = vld [vmem:[#allocation11 + $0xc0] sm:$0xff]
    %v849 = vld [vmem:[#allocation11 + $0xc8] sm:$0xff]
    %v850 = vld [vmem:[#allocation11 + $0xd0] sm:$0xff]
    %v851 = vld [vmem:[#allocation11 + $0xd8] sm:$0xff]
    %v852 = vld [vmem:[#allocation11 + $0xe0] sm:$0xff]
    %v853 = vld [vmem:[#allocation11 + $0xe8] sm:$0xff]
    %v854 = vld [vmem:[#allocation11 + $0xf0] sm:$0xff]
    %v855 = vld [vmem:[#allocation11 + $0xf8] sm:$0xff]
    %v856 = vld [vmem:[#allocation11 + $0x100] sm:$0xff]
    %v857 = vld [vmem:[#allocation11 + $0x108] sm:$0xff]
    %v858 = vld [vmem:[#allocation11 + $0x110] sm:$0xff]
    %v859 = vld [vmem:[#allocation11 + $0x118] sm:$0xff]
    %v860 = vld [vmem:[#allocation11 + $0x120] sm:$0xff]
    %v861 = vld [vmem:[#allocation11 + $0x128] sm:$0xff]
    %v862 = vld [vmem:[#allocation11 + $0x130] sm:$0xff]
    %v863 = vld [vmem:[#allocation11 + $0x138] sm:$0xff]
    %v864 = vld [vmem:[#allocation11 + $0x140] sm:$0xff]
    %v865 = vld [vmem:[#allocation11 + $0x148] sm:$0xff]
    %v866 = vld [vmem:[#allocation11 + $0x150] sm:$0xff]
    %v867 = vld [vmem:[#allocation11 + $0x158] sm:$0xff]
    %v868 = vld [vmem:[#allocation11 + $0x160] sm:$0xff]
    %v869 = vld [vmem:[#allocation11 + $0x168] sm:$0xff]
    %v870 = vld [vmem:[#allocation11 + $0x170] sm:$0xff]
    %v871 = vld [vmem:[#allocation11 + $0x178] sm:$0xff]
    %v872 = vld [vmem:[#allocation11 + $0x180] sm:$0xff]
    %v873 = vld [vmem:[#allocation11 + $0x188] sm:$0xff]
    %v874 = vld [vmem:[#allocation11 + $0x190] sm:$0xff]
    %v875 = vld [vmem:[#allocation11 + $0x198] sm:$0xff]
    %v876 = vld [vmem:[#allocation11 + $0x1a0] sm:$0xff]
    %v877 = vld [vmem:[#allocation11 + $0x1a8] sm:$0xff]
    %v878 = vld [vmem:[#allocation11 + $0x1b0] sm:$0xff]
    %v879 = vld [vmem:[#allocation11 + $0x1b8] sm:$0xff]
    %v880 = vld [vmem:[#allocation11 + $0x1c0] sm:$0xff]
    %v881 = vld [vmem:[#allocation11 + $0x1c8] sm:$0xff]
    %v882 = vld [vmem:[#allocation11 + $0x1d0] sm:$0xff]
    %v883 = vld [vmem:[#allocation11 + $0x1d8] sm:$0xff]
    %v884 = vld [vmem:[#allocation11 + $0x1e0] sm:$0xff]
    %v885 = vld [vmem:[#allocation11 + $0x1e8] sm:$0xff]
    %v886 = vld [vmem:[#allocation11 + $0x1f0] sm:$0xff]
    %v887 = vld [vmem:[#allocation11 + $0x1f8] sm:$0xff]
    %v888 = vld [vmem:[#allocation11 + $0x200] sm:$0xff]
    %v889 = vld [vmem:[#allocation11 + $0x208] sm:$0xff]
    %v890 = vld [vmem:[#allocation11 + $0x210] sm:$0xff]
    %v891 = vld [vmem:[#allocation11 + $0x218] sm:$0xff]
    %v892 = vld [vmem:[#allocation11 + $0x220] sm:$0xff]
    %v893 = vld [vmem:[#allocation11 + $0x228] sm:$0xff]
    %v894 = vld [vmem:[#allocation11 + $0x230] sm:$0xff]
    %v895 = vld [vmem:[#allocation11 + $0x238] sm:$0xff]
    %v896 = vld [vmem:[#allocation11 + $0x240] sm:$0xff]
    %v897 = vld [vmem:[#allocation11 + $0x248] sm:$0xff]
    %v898 = vld [vmem:[#allocation11 + $0x250] sm:$0xff]
    %v899 = vld [vmem:[#allocation11 + $0x258] sm:$0xff]
    %v900 = vld [vmem:[#allocation11 + $0x260] sm:$0xff]
    %v901 = vld [vmem:[#allocation11 + $0x268] sm:$0xff]
    %v902 = vld [vmem:[#allocation11 + $0x270] sm:$0xff]
    %v903 = vld [vmem:[#allocation11 + $0x278] sm:$0xff]
    %v904 = vld [vmem:[#allocation11 + $0x280] sm:$0xff]
    %v905 = vld [vmem:[#allocation11 + $0x288] sm:$0xff]
    %v906 = vld [vmem:[#allocation11 + $0x290] sm:$0xff]
    %v907 = vld [vmem:[#allocation11 + $0x298] sm:$0xff]
    %v908 = vld [vmem:[#allocation11 + $0x2a0] sm:$0xff]
    %v909 = vld [vmem:[#allocation11 + $0x2a8] sm:$0xff]
    %v910 = vld [vmem:[#allocation11 + $0x2b0] sm:$0xff]
    %v911 = vld [vmem:[#allocation11 + $0x2b8] sm:$0xff]
    %v912 = vld [vmem:[#allocation11 + $0x2c0] sm:$0xff]
    %v913 = vld [vmem:[#allocation11 + $0x2c8] sm:$0xff]
    %v914 = vld [vmem:[#allocation11 + $0x2d0] sm:$0xff]
    %v915 = vld [vmem:[#allocation11 + $0x2d8] sm:$0xff]
    %v916 = vld [vmem:[#allocation11 + $0x2e0] sm:$0xff]
    %v917 = vld [vmem:[#allocation11 + $0x2e8] sm:$0xff]
    %v918 = vld [vmem:[#allocation11 + $0x2f0] sm:$0xff]
    %v919 = vld [vmem:[#allocation11 + $0x2f8] sm:$0xff]
    %v920 = vld [vmem:[#allocation11 + $0x300] sm:$0xff]
    %v921 = vld [vmem:[#allocation11 + $0x308] sm:$0xff]
    %v922 = vld [vmem:[#allocation11 + $0x310] sm:$0xff]
    %v923 = vld [vmem:[#allocation11 + $0x318] sm:$0xff]
    %v924 = vld [vmem:[#allocation11 + $0x320] sm:$0xff]
    %v925 = vld [vmem:[#allocation11 + $0x328] sm:$0xff]
    %v926 = vld [vmem:[#allocation11 + $0x330] sm:$0xff]
    %v927 = vld [vmem:[#allocation11 + $0x338] sm:$0xff]
    %v928 = vld [vmem:[#allocation11 + $0x340] sm:$0xff]
    %v929 = vld [vmem:[#allocation11 + $0x348] sm:$0xff]
    %v930 = vld [vmem:[#allocation11 + $0x350] sm:$0xff]
    %v931 = vld [vmem:[#allocation11 + $0x358] sm:$0xff]
    %v932 = vld [vmem:[#allocation11 + $0x360] sm:$0xff]
    %v933 = vld [vmem:[#allocation11 + $0x368] sm:$0xff]
    %v934 = vld [vmem:[#allocation11 + $0x370] sm:$0xff]
    %v935 = vld [vmem:[#allocation11 + $0x378] sm:$0xff]
    %v936 = vld [vmem:[#allocation11 + $0x380] sm:$0xff]
    %v937 = vld [vmem:[#allocation11 + $0x388] sm:$0xff]
    %v938 = vld [vmem:[#allocation11 + $0x390] sm:$0xff]
    %v939 = vld [vmem:[#allocation11 + $0x398] sm:$0xff]
    %v940 = vld [vmem:[#allocation11 + $0x3a0] sm:$0xff]
    %v941 = vld [vmem:[#allocation11 + $0x3a8] sm:$0xff]
    %v942 = vld [vmem:[#allocation11 + $0x3b0] sm:$0xff]
    %v943 = vld [vmem:[#allocation11 + $0x3b8] sm:$0xff]
    %v944 = vld [vmem:[#allocation11 + $0x3c0] sm:$0xff]
    %v945 = vld [vmem:[#allocation11 + $0x3c8] sm:$0xff]
    %v946 = vld [vmem:[#allocation11 + $0x3d0] sm:$0xff]
    %v947 = vld [vmem:[#allocation11 + $0x3d8] sm:$0xff]
    %v948 = vld [vmem:[#allocation11 + $0x3e0] sm:$0xff]
    %v949 = vld [vmem:[#allocation11 + $0x3e8] sm:$0xff]
    %v950 = vld [vmem:[#allocation11 + $0x3f0] sm:$0xff]
    %v951 = vld [vmem:[#allocation11 + $0x3f8] sm:$0xff]
    %v952 = vld [vmem:[#allocation13] sm:$0xff]
    %v954 = vperm.slane %v952, 0
    %v955 = vperm.slane %v952, 1
    %v956 = vperm.slane %v952, 2
    %v957 = vperm.slane %v952, 3
    %v958 = vperm.slane %v952, 4
    %v959 = vperm.slane %v952, 5
    %v960 = vperm.slane %v952, 6
    %v961 = vperm.slane %v952, 7
    %v1098 = vunpack.c.l.b16 %v824
    %v1099 = vunpack.c.h.b16 %v824
    %v1100 = vunpack.c.l.b16 %v825
    %v1101 = vunpack.c.h.b16 %v825
    %v1102 = vunpack.c.l.b16 %v826
    %v1103 = vunpack.c.h.b16 %v826
    %v1104 = vunpack.c.l.b16 %v827
    %v1105 = vunpack.c.h.b16 %v827
    %v1106 = vunpack.c.l.b16 %v828
    %v1107 = vunpack.c.h.b16 %v828
    %v1108 = vunpack.c.l.b16 %v829
    %v1109 = vunpack.c.h.b16 %v829
    %v1110 = vunpack.c.l.b16 %v830
    %v1111 = vunpack.c.h.b16 %v830
    %v1112 = vunpack.c.l.b16 %v831
    %v1113 = vunpack.c.h.b16 %v831
    %v1114 = vunpack.c.l.b16 %v832
    %v1115 = vunpack.c.h.b16 %v832
    %v1116 = vunpack.c.l.b16 %v833
    %v1117 = vunpack.c.h.b16 %v833
    %v1118 = vunpack.c.l.b16 %v834
    %v1119 = vunpack.c.h.b16 %v834
    %v1120 = vunpack.c.l.b16 %v835
    %v1121 = vunpack.c.h.b16 %v835
    %v1122 = vunpack.c.l.b16 %v836
    %v1123 = vunpack.c.h.b16 %v836
    %v1124 = vunpack.c.l.b16 %v837
    %v1125 = vunpack.c.h.b16 %v837
    %v1126 = vunpack.c.l.b16 %v838
    %v1127 = vunpack.c.h.b16 %v838
    %v1128 = vunpack.c.l.b16 %v839
    %v1129 = vunpack.c.h.b16 %v839
    %v1130 = vunpack.c.l.b16 %v840
    %v1131 = vunpack.c.h.b16 %v840
    %v1132 = vunpack.c.l.b16 %v841
    %v1133 = vunpack.c.h.b16 %v841
    %v1134 = vunpack.c.l.b16 %v842
    %v1135 = vunpack.c.h.b16 %v842
    %v1136 = vunpack.c.l.b16 %v843
    %v1137 = vunpack.c.h.b16 %v843
    %v1138 = vunpack.c.l.b16 %v844
    %v1139 = vunpack.c.h.b16 %v844
    %v1140 = vunpack.c.l.b16 %v845
    %v1141 = vunpack.c.h.b16 %v845
    %v1142 = vunpack.c.l.b16 %v846
    %v1143 = vunpack.c.h.b16 %v846
    %v1144 = vunpack.c.l.b16 %v847
    %v1145 = vunpack.c.h.b16 %v847
    %v1146 = vunpack.c.l.b16 %v848
    %v1147 = vunpack.c.h.b16 %v848
    %v1148 = vunpack.c.l.b16 %v849
    %v1149 = vunpack.c.h.b16 %v849
    %v1150 = vunpack.c.l.b16 %v850
    %v1151 = vunpack.c.h.b16 %v850
    %v1152 = vunpack.c.l.b16 %v851
    %v1153 = vunpack.c.h.b16 %v851
    %v1154 = vunpack.c.l.b16 %v852
    %v1155 = vunpack.c.h.b16 %v852
    %v1156 = vunpack.c.l.b16 %v853
    %v1157 = vunpack.c.h.b16 %v853
    %v1158 = vunpack.c.l.b16 %v854
    %v1159 = vunpack.c.h.b16 %v854
    %v1160 = vunpack.c.l.b16 %v855
    %v1161 = vunpack.c.h.b16 %v855
    %v1162 = vunpack.c.l.b16 %v856
    %v1163 = vunpack.c.h.b16 %v856
    %v1164 = vunpack.c.l.b16 %v857
    %v1165 = vunpack.c.h.b16 %v857
    %v1166 = vunpack.c.l.b16 %v858
    %v1167 = vunpack.c.h.b16 %v858
    %v1168 = vunpack.c.l.b16 %v859
    %v1169 = vunpack.c.h.b16 %v859
    %v1170 = vunpack.c.l.b16 %v860
    %v1171 = vunpack.c.h.b16 %v860
    %v1172 = vunpack.c.l.b16 %v861
    %v1173 = vunpack.c.h.b16 %v861
    %v1174 = vunpack.c.l.b16 %v862
    %v1175 = vunpack.c.h.b16 %v862
    %v1176 = vunpack.c.l.b16 %v863
    %v1177 = vunpack.c.h.b16 %v863
    %v1178 = vunpack.c.l.b16 %v864
    %v1179 = vunpack.c.h.b16 %v864
    %v1180 = vunpack.c.l.b16 %v865
    %v1181 = vunpack.c.h.b16 %v865
    %v1182 = vunpack.c.l.b16 %v866
    %v1183 = vunpack.c.h.b16 %v866
    %v1184 = vunpack.c.l.b16 %v867
    %v1185 = vunpack.c.h.b16 %v867
    %v1186 = vunpack.c.l.b16 %v868
    %v1187 = vunpack.c.h.b16 %v868
    %v1188 = vunpack.c.l.b16 %v869
    %v1189 = vunpack.c.h.b16 %v869
    %v1190 = vunpack.c.l.b16 %v870
    %v1191 = vunpack.c.h.b16 %v870
    %v1192 = vunpack.c.l.b16 %v871
    %v1193 = vunpack.c.h.b16 %v871
    %v1194 = vunpack.c.l.b16 %v872
    %v1195 = vunpack.c.h.b16 %v872
    %v1196 = vunpack.c.l.b16 %v873
    %v1197 = vunpack.c.h.b16 %v873
    %v1198 = vunpack.c.l.b16 %v874
    %v1199 = vunpack.c.h.b16 %v874
    %v1200 = vunpack.c.l.b16 %v875
    %v1201 = vunpack.c.h.b16 %v875
    %v1202 = vunpack.c.l.b16 %v876
    %v1203 = vunpack.c.h.b16 %v876
    %v1204 = vunpack.c.l.b16 %v877
    %v1205 = vunpack.c.h.b16 %v877
    %v1206 = vunpack.c.l.b16 %v878
    %v1207 = vunpack.c.h.b16 %v878
    %v1208 = vunpack.c.l.b16 %v879
    %v1209 = vunpack.c.h.b16 %v879
    %v1210 = vunpack.c.l.b16 %v880
    %v1211 = vunpack.c.h.b16 %v880
    %v1212 = vunpack.c.l.b16 %v881
    %v1213 = vunpack.c.h.b16 %v881
    %v1214 = vunpack.c.l.b16 %v882
    %v1215 = vunpack.c.h.b16 %v882
    %v1216 = vunpack.c.l.b16 %v883
    %v1217 = vunpack.c.h.b16 %v883
    %v1218 = vunpack.c.l.b16 %v884
    %v1219 = vunpack.c.h.b16 %v884
    %v1220 = vunpack.c.l.b16 %v885
    %v1221 = vunpack.c.h.b16 %v885
    %v1222 = vunpack.c.l.b16 %v886
    %v1223 = vunpack.c.h.b16 %v886
    %v1224 = vunpack.c.l.b16 %v887
    %v1225 = vunpack.c.h.b16 %v887
    %v1226 = vunpack.c.l.b16 %v888
    %v1227 = vunpack.c.h.b16 %v888
    %v1228 = vunpack.c.l.b16 %v889
    %v1229 = vunpack.c.h.b16 %v889
    %v1230 = vunpack.c.l.b16 %v890
    %v1231 = vunpack.c.h.b16 %v890
    %v1232 = vunpack.c.l.b16 %v891
    %v1233 = vunpack.c.h.b16 %v891
    %v1234 = vunpack.c.l.b16 %v892
    %v1235 = vunpack.c.h.b16 %v892
    %v1236 = vunpack.c.l.b16 %v893
    %v1237 = vunpack.c.h.b16 %v893
    %v1238 = vunpack.c.l.b16 %v894
    %v1239 = vunpack.c.h.b16 %v894
    %v1240 = vunpack.c.l.b16 %v895
    %v1241 = vunpack.c.h.b16 %v895
    %v1242 = vunpack.c.l.b16 %v896
    %v1243 = vunpack.c.h.b16 %v896
    %v1244 = vunpack.c.l.b16 %v897
    %v1245 = vunpack.c.h.b16 %v897
    %v1246 = vunpack.c.l.b16 %v898
    %v1247 = vunpack.c.h.b16 %v898
    %v1248 = vunpack.c.l.b16 %v899
    %v1249 = vunpack.c.h.b16 %v899
    %v1250 = vunpack.c.l.b16 %v900
    %v1251 = vunpack.c.h.b16 %v900
    %v1252 = vunpack.c.l.b16 %v901
    %v1253 = vunpack.c.h.b16 %v901
    %v1254 = vunpack.c.l.b16 %v902
    %v1255 = vunpack.c.h.b16 %v902
    %v1256 = vunpack.c.l.b16 %v903
    %v1257 = vunpack.c.h.b16 %v903
    %v1258 = vunpack.c.l.b16 %v904
    %v1259 = vunpack.c.h.b16 %v904
    %v1260 = vunpack.c.l.b16 %v905
    %v1261 = vunpack.c.h.b16 %v905
    %v1262 = vunpack.c.l.b16 %v906
    %v1263 = vunpack.c.h.b16 %v906
    %v1264 = vunpack.c.l.b16 %v907
    %v1265 = vunpack.c.h.b16 %v907
    %v1266 = vunpack.c.l.b16 %v908
    %v1267 = vunpack.c.h.b16 %v908
    %v1268 = vunpack.c.l.b16 %v909
    %v1269 = vunpack.c.h.b16 %v909
    %v1270 = vunpack.c.l.b16 %v910
    %v1271 = vunpack.c.h.b16 %v910
    %v1272 = vunpack.c.l.b16 %v911
    %v1273 = vunpack.c.h.b16 %v911
    %v1274 = vunpack.c.l.b16 %v912
    %v1275 = vunpack.c.h.b16 %v912
    %v1276 = vunpack.c.l.b16 %v913
    %v1277 = vunpack.c.h.b16 %v913
    %v1278 = vunpack.c.l.b16 %v914
    %v1279 = vunpack.c.h.b16 %v914
    %v1280 = vunpack.c.l.b16 %v915
    %v1281 = vunpack.c.h.b16 %v915
    %v1282 = vunpack.c.l.b16 %v916
    %v1283 = vunpack.c.h.b16 %v916
    %v1284 = vunpack.c.l.b16 %v917
    %v1285 = vunpack.c.h.b16 %v917
    %v1286 = vunpack.c.l.b16 %v918
    %v1287 = vunpack.c.h.b16 %v918
    %v1288 = vunpack.c.l.b16 %v919
    %v1289 = vunpack.c.h.b16 %v919
    %v1290 = vunpack.c.l.b16 %v920
    %v1291 = vunpack.c.h.b16 %v920
    %v1292 = vunpack.c.l.b16 %v921
    %v1293 = vunpack.c.h.b16 %v921
    %v1294 = vunpack.c.l.b16 %v922
    %v1295 = vunpack.c.h.b16 %v922
    %v1296 = vunpack.c.l.b16 %v923
    %v1297 = vunpack.c.h.b16 %v923
    %v1298 = vunpack.c.l.b16 %v924
    %v1299 = vunpack.c.h.b16 %v924
    %v1300 = vunpack.c.l.b16 %v925
    %v1301 = vunpack.c.h.b16 %v925
    %v1302 = vunpack.c.l.b16 %v926
    %v1303 = vunpack.c.h.b16 %v926
    %v1304 = vunpack.c.l.b16 %v927
    %v1305 = vunpack.c.h.b16 %v927
    %v1306 = vunpack.c.l.b16 %v928
    %v1307 = vunpack.c.h.b16 %v928
    %v1308 = vunpack.c.l.b16 %v929
    %v1309 = vunpack.c.h.b16 %v929
    %v1310 = vunpack.c.l.b16 %v930
    %v1311 = vunpack.c.h.b16 %v930
    %v1312 = vunpack.c.l.b16 %v931
    %v1313 = vunpack.c.h.b16 %v931
    %v1314 = vunpack.c.l.b16 %v932
    %v1315 = vunpack.c.h.b16 %v932
    %v1316 = vunpack.c.l.b16 %v933
    %v1317 = vunpack.c.h.b16 %v933
    %v1318 = vunpack.c.l.b16 %v934
    %v1319 = vunpack.c.h.b16 %v934
    %v1320 = vunpack.c.l.b16 %v935
    %v1321 = vunpack.c.h.b16 %v935
    %v1322 = vunpack.c.l.b16 %v936
    %v1323 = vunpack.c.h.b16 %v936
    %v1324 = vunpack.c.l.b16 %v937
    %v1325 = vunpack.c.h.b16 %v937
    %v1326 = vunpack.c.l.b16 %v938
    %v1327 = vunpack.c.h.b16 %v938
    %v1328 = vunpack.c.l.b16 %v939
    %v1329 = vunpack.c.h.b16 %v939
    %v1330 = vunpack.c.l.b16 %v940
    %v1331 = vunpack.c.h.b16 %v940
    %v1332 = vunpack.c.l.b16 %v941
    %v1333 = vunpack.c.h.b16 %v941
    %v1334 = vunpack.c.l.b16 %v942
    %v1335 = vunpack.c.h.b16 %v942
    %v1336 = vunpack.c.l.b16 %v943
    %v1337 = vunpack.c.h.b16 %v943
    %v1338 = vunpack.c.l.b16 %v944
    %v1339 = vunpack.c.h.b16 %v944
    %v1340 = vunpack.c.l.b16 %v945
    %v1341 = vunpack.c.h.b16 %v945
    %v1342 = vunpack.c.l.b16 %v946
    %v1343 = vunpack.c.h.b16 %v946
    %v1344 = vunpack.c.l.b16 %v947
    %v1345 = vunpack.c.h.b16 %v947
    %v1346 = vunpack.c.l.b16 %v948
    %v1347 = vunpack.c.h.b16 %v948
    %v1348 = vunpack.c.l.b16 %v949
    %v1349 = vunpack.c.h.b16 %v949
    %v1350 = vunpack.c.l.b16 %v950
    %v1351 = vunpack.c.h.b16 %v950
    %v1352 = vunpack.c.l.b16 %v951
    %v1353 = vunpack.c.h.b16 %v951
    %v1354 = vpack.c.b16 %v1106, %v1098
    %v1355 = vpack.c.b16 %v1107, %v1099
    %v1356 = vpack.c.b16 %v1108, %v1100
    %v1357 = vpack.c.b16 %v1109, %v1101
    %v1358 = vpack.c.b16 %v1110, %v1102
    %v1359 = vpack.c.b16 %v1111, %v1103
    %v1360 = vpack.c.b16 %v1112, %v1104
    %v1361 = vpack.c.b16 %v1113, %v1105
    %v1362 = vpack.c.b16 %v1122, %v1114
    %v1363 = vpack.c.b16 %v1123, %v1115
    %v1364 = vpack.c.b16 %v1124, %v1116
    %v1365 = vpack.c.b16 %v1125, %v1117
    %v1366 = vpack.c.b16 %v1126, %v1118
    %v1367 = vpack.c.b16 %v1127, %v1119
    %v1368 = vpack.c.b16 %v1128, %v1120
    %v1369 = vpack.c.b16 %v1129, %v1121
    %v1370 = vpack.c.b16 %v1138, %v1130
    %v1371 = vpack.c.b16 %v1139, %v1131
    %v1372 = vpack.c.b16 %v1140, %v1132
    %v1373 = vpack.c.b16 %v1141, %v1133
    %v1374 = vpack.c.b16 %v1142, %v1134
    %v1375 = vpack.c.b16 %v1143, %v1135
    %v1376 = vpack.c.b16 %v1144, %v1136
    %v1377 = vpack.c.b16 %v1145, %v1137
    %v1378 = vpack.c.b16 %v1154, %v1146
    %v1379 = vpack.c.b16 %v1155, %v1147
    %v1380 = vpack.c.b16 %v1156, %v1148
    %v1381 = vpack.c.b16 %v1157, %v1149
    %v1382 = vpack.c.b16 %v1158, %v1150
    %v1383 = vpack.c.b16 %v1159, %v1151
    %v1384 = vpack.c.b16 %v1160, %v1152
    %v1385 = vpack.c.b16 %v1161, %v1153
    %v1386 = vpack.c.b16 %v1170, %v1162
    %v1387 = vpack.c.b16 %v1171, %v1163
    %v1388 = vpack.c.b16 %v1172, %v1164
    %v1389 = vpack.c.b16 %v1173, %v1165
    %v1390 = vpack.c.b16 %v1174, %v1166
    %v1391 = vpack.c.b16 %v1175, %v1167
    %v1392 = vpack.c.b16 %v1176, %v1168
    %v1393 = vpack.c.b16 %v1177, %v1169
    %v1394 = vpack.c.b16 %v1186, %v1178
    %v1395 = vpack.c.b16 %v1187, %v1179
    %v1396 = vpack.c.b16 %v1188, %v1180
    %v1397 = vpack.c.b16 %v1189, %v1181
    %v1398 = vpack.c.b16 %v1190, %v1182
    %v1399 = vpack.c.b16 %v1191, %v1183
    %v1400 = vpack.c.b16 %v1192, %v1184
    %v1401 = vpack.c.b16 %v1193, %v1185
    %v1402 = vpack.c.b16 %v1202, %v1194
    %v1403 = vpack.c.b16 %v1203, %v1195
    %v1404 = vpack.c.b16 %v1204, %v1196
    %v1405 = vpack.c.b16 %v1205, %v1197
    %v1406 = vpack.c.b16 %v1206, %v1198
    %v1407 = vpack.c.b16 %v1207, %v1199
    %v1408 = vpack.c.b16 %v1208, %v1200
    %v1409 = vpack.c.b16 %v1209, %v1201
    %v1410 = vpack.c.b16 %v1218, %v1210
    %v1411 = vpack.c.b16 %v1219, %v1211
    %v1412 = vpack.c.b16 %v1220, %v1212
    %v1413 = vpack.c.b16 %v1221, %v1213
    %v1414 = vpack.c.b16 %v1222, %v1214
    %v1415 = vpack.c.b16 %v1223, %v1215
    %v1416 = vpack.c.b16 %v1224, %v1216
    %v1417 = vpack.c.b16 %v1225, %v1217
    %v1418 = vpack.c.b16 %v1234, %v1226
    %v1419 = vpack.c.b16 %v1235, %v1227
    %v1420 = vpack.c.b16 %v1236, %v1228
    %v1421 = vpack.c.b16 %v1237, %v1229
    %v1422 = vpack.c.b16 %v1238, %v1230
    %v1423 = vpack.c.b16 %v1239, %v1231
    %v1424 = vpack.c.b16 %v1240, %v1232
    %v1425 = vpack.c.b16 %v1241, %v1233
    %v1426 = vpack.c.b16 %v1250, %v1242
    %v1427 = vpack.c.b16 %v1251, %v1243
    %v1428 = vpack.c.b16 %v1252, %v1244
    %v1429 = vpack.c.b16 %v1253, %v1245
    %v1430 = vpack.c.b16 %v1254, %v1246
    %v1431 = vpack.c.b16 %v1255, %v1247
    %v1432 = vpack.c.b16 %v1256, %v1248
    %v1433 = vpack.c.b16 %v1257, %v1249
    %v1434 = vpack.c.b16 %v1266, %v1258
    %v1435 = vpack.c.b16 %v1267, %v1259
    %v1436 = vpack.c.b16 %v1268, %v1260
    %v1437 = vpack.c.b16 %v1269, %v1261
    %v1438 = vpack.c.b16 %v1270, %v1262
    %v1439 = vpack.c.b16 %v1271, %v1263
    %v1440 = vpack.c.b16 %v1272, %v1264
    %v1441 = vpack.c.b16 %v1273, %v1265
    %v1442 = vpack.c.b16 %v1282, %v1274
    %v1443 = vpack.c.b16 %v1283, %v1275
    %v1444 = vpack.c.b16 %v1284, %v1276
    %v1445 = vpack.c.b16 %v1285, %v1277
    %v1446 = vpack.c.b16 %v1286, %v1278
    %v1447 = vpack.c.b16 %v1287, %v1279
    %v1448 = vpack.c.b16 %v1288, %v1280
    %v1449 = vpack.c.b16 %v1289, %v1281
    %v1450 = vpack.c.b16 %v1298, %v1290
    %v1451 = vpack.c.b16 %v1299, %v1291
    %v1452 = vpack.c.b16 %v1300, %v1292
    %v1453 = vpack.c.b16 %v1301, %v1293
    %v1454 = vpack.c.b16 %v1302, %v1294
    %v1455 = vpack.c.b16 %v1303, %v1295
    %v1456 = vpack.c.b16 %v1304, %v1296
    %v1457 = vpack.c.b16 %v1305, %v1297
    %v1458 = vpack.c.b16 %v1314, %v1306
    %v1459 = vpack.c.b16 %v1315, %v1307
    %v1460 = vpack.c.b16 %v1316, %v1308
    %v1461 = vpack.c.b16 %v1317, %v1309
    %v1462 = vpack.c.b16 %v1318, %v1310
    %v1463 = vpack.c.b16 %v1319, %v1311
    %v1464 = vpack.c.b16 %v1320, %v1312
    %v1465 = vpack.c.b16 %v1321, %v1313
    %v1466 = vpack.c.b16 %v1330, %v1322
    %v1467 = vpack.c.b16 %v1331, %v1323
    %v1468 = vpack.c.b16 %v1332, %v1324
    %v1469 = vpack.c.b16 %v1333, %v1325
    %v1470 = vpack.c.b16 %v1334, %v1326
    %v1471 = vpack.c.b16 %v1335, %v1327
    %v1472 = vpack.c.b16 %v1336, %v1328
    %v1473 = vpack.c.b16 %v1337, %v1329
    %v1474 = vpack.c.b16 %v1346, %v1338
    %v1475 = vpack.c.b16 %v1347, %v1339
    %v1476 = vpack.c.b16 %v1348, %v1340
    %v1477 = vpack.c.b16 %v1349, %v1341
    %v1478 = vpack.c.b16 %v1350, %v1342
    %v1479 = vpack.c.b16 %v1351, %v1343
    %v1480 = vpack.c.b16 %v1352, %v1344
    %v1481 = vpack.c.b16 %v1353, %v1345
    %1610 = vmatpush.bf16.msra.mxu0 %v1410
    %1611 = vmatpush.bf16.msra.mxu0 %v1402
    %1612 = vmatpush.bf16.msra.mxu0 %v1394
    %1613 = vmatpush.bf16.msra.mxu0 %v1386
    %1614 = vmatpush.bf16.msra.mxu0 %v1378
    %1615 = vmatpush.bf16.msra.mxu0 %v1370
    %1616 = vmatpush.bf16.msra.mxu0 %v1362
    %1617 = vmatpush.bf16.msra.mxu0 %v1354
    %1618 = vmatmul.bf16.gmra.mxu0 %v822
    %v1619 = vpop.f32.mrf.mxu0
    %v1620 = vadd.f32 %v954, %v1619
    %v1621 = vpop.f32.mrf.mxu0
    %1622 = vdwg.mxu0
    %1623 = vmatpush.bf16.msra.mxu0 %v1474
    %1624 = vmatpush.bf16.msra.mxu0 %v1466
    %1625 = vmatpush.bf16.msra.mxu0 %v1458
    %1626 = vmatpush.bf16.msra.mxu0 %v1450
    %1627 = vmatpush.bf16.msra.mxu0 %v1442
    %1628 = vmatpush.bf16.msra.mxu0 %v1434
    %1629 = vmatpush.bf16.msra.mxu0 %v1426
    %1630 = vmatpush.bf16.msra.mxu0 %v1418
    %1631 = vmatmul.bf16.gmra.mxu0 %v823
    %v1632 = vpop.f32.mrf.mxu0
    %v1633 = vadd.f32 %v1620, %v1632
    %v1634 = vpop.f32.mrf.mxu0
    %1635 = vdwg.mxu0
    %1636 = vmatpush.bf16.msra.mxu0 %v1411
    %1637 = vmatpush.bf16.msra.mxu0 %v1403
    %1638 = vmatpush.bf16.msra.mxu0 %v1395
    %1639 = vmatpush.bf16.msra.mxu0 %v1387
    %1640 = vmatpush.bf16.msra.mxu0 %v1379
    %1641 = vmatpush.bf16.msra.mxu0 %v1371
    %1642 = vmatpush.bf16.msra.mxu0 %v1363
    %1643 = vmatpush.bf16.msra.mxu0 %v1355
    %1644 = vmatmul.bf16.gmra.mxu0 %v822
    %v1645 = vpop.f32.mrf.mxu0
    %v1646 = vadd.f32 %v955, %v1645
    %v1647 = vpop.f32.mrf.mxu0
    %1648 = vdwg.mxu0
    %1649 = vmatpush.bf16.msra.mxu0 %v1475
    %1650 = vmatpush.bf16.msra.mxu0 %v1467
    %1651 = vmatpush.bf16.msra.mxu0 %v1459
    %1652 = vmatpush.bf16.msra.mxu0 %v1451
    %1653 = vmatpush.bf16.msra.mxu0 %v1443
    %1654 = vmatpush.bf16.msra.mxu0 %v1435
    %1655 = vmatpush.bf16.msra.mxu0 %v1427
    %1656 = vmatpush.bf16.msra.mxu0 %v1419
    %1657 = vmatmul.bf16.gmra.mxu0 %v823
    %v1658 = vpop.f32.mrf.mxu0
    %v1659 = vadd.f32 %v1646, %v1658
    %v1660 = vpop.f32.mrf.mxu0
    %1661 = vdwg.mxu0
    %1662 = vmatpush.bf16.msra.mxu0 %v1412
    %1663 = vmatpush.bf16.msra.mxu0 %v1404
    %1664 = vmatpush.bf16.msra.mxu0 %v1396
    %1665 = vmatpush.bf16.msra.mxu0 %v1388
    %1666 = vmatpush.bf16.msra.mxu0 %v1380
    %1667 = vmatpush.bf16.msra.mxu0 %v1372
    %1668 = vmatpush.bf16.msra.mxu0 %v1364
    %1669 = vmatpush.bf16.msra.mxu0 %v1356
    %1670 = vmatmul.bf16.gmra.mxu0 %v822
    %v1671 = vpop.f32.mrf.mxu0
    %v1672 = vadd.f32 %v956, %v1671
    %v1673 = vpop.f32.mrf.mxu0
    %1674 = vdwg.mxu0
    %1675 = vmatpush.bf16.msra.mxu0 %v1476
    %1676 = vmatpush.bf16.msra.mxu0 %v1468
    %1677 = vmatpush.bf16.msra.mxu0 %v1460
    %1678 = vmatpush.bf16.msra.mxu0 %v1452
    %1679 = vmatpush.bf16.msra.mxu0 %v1444
    %1680 = vmatpush.bf16.msra.mxu0 %v1436
    %1681 = vmatpush.bf16.msra.mxu0 %v1428
    %1682 = vmatpush.bf16.msra.mxu0 %v1420
    %1683 = vmatmul.bf16.gmra.mxu0 %v823
    %v1684 = vpop.f32.mrf.mxu0
    %v1685 = vadd.f32 %v1672, %v1684
    %v1686 = vpop.f32.mrf.mxu0
    %1687 = vdwg.mxu0
    %1688 = vmatpush.bf16.msra.mxu0 %v1413
    %1689 = vmatpush.bf16.msra.mxu0 %v1405
    %1690 = vmatpush.bf16.msra.mxu0 %v1397
    %1691 = vmatpush.bf16.msra.mxu0 %v1389
    %1692 = vmatpush.bf16.msra.mxu0 %v1381
    %1693 = vmatpush.bf16.msra.mxu0 %v1373
    %1694 = vmatpush.bf16.msra.mxu0 %v1365
    %1695 = vmatpush.bf16.msra.mxu0 %v1357
    %1696 = vmatmul.bf16.gmra.mxu0 %v822
    %v1697 = vpop.f32.mrf.mxu0
    %v1698 = vadd.f32 %v957, %v1697
    %v1699 = vpop.f32.mrf.mxu0
    %1700 = vdwg.mxu0
    %1701 = vmatpush.bf16.msra.mxu0 %v1477
    %1702 = vmatpush.bf16.msra.mxu0 %v1469
    %1703 = vmatpush.bf16.msra.mxu0 %v1461
    %1704 = vmatpush.bf16.msra.mxu0 %v1453
    %1705 = vmatpush.bf16.msra.mxu0 %v1445
    %1706 = vmatpush.bf16.msra.mxu0 %v1437
    %1707 = vmatpush.bf16.msra.mxu0 %v1429
    %1708 = vmatpush.bf16.msra.mxu0 %v1421
    %1709 = vmatmul.bf16.gmra.mxu0 %v823
    %v1710 = vpop.f32.mrf.mxu0
    %v1711 = vadd.f32 %v1698, %v1710
    %v1712 = vpop.f32.mrf.mxu0
    %1713 = vdwg.mxu0
    %1714 = vmatpush.bf16.msra.mxu0 %v1414
    %1715 = vmatpush.bf16.msra.mxu0 %v1406
    %1716 = vmatpush.bf16.msra.mxu0 %v1398
    %1717 = vmatpush.bf16.msra.mxu0 %v1390
    %1718 = vmatpush.bf16.msra.mxu0 %v1382
    %1719 = vmatpush.bf16.msra.mxu0 %v1374
    %1720 = vmatpush.bf16.msra.mxu0 %v1366
    %1721 = vmatpush.bf16.msra.mxu0 %v1358
    %1722 = vmatmul.bf16.gmra.mxu0 %v822
    %v1723 = vpop.f32.mrf.mxu0
    %v1724 = vadd.f32 %v958, %v1723
    %v1725 = vpop.f32.mrf.mxu0
    %1726 = vdwg.mxu0
    %1727 = vmatpush.bf16.msra.mxu0 %v1478
    %1728 = vmatpush.bf16.msra.mxu0 %v1470
    %1729 = vmatpush.bf16.msra.mxu0 %v1462
    %1730 = vmatpush.bf16.msra.mxu0 %v1454
    %1731 = vmatpush.bf16.msra.mxu0 %v1446
    %1732 = vmatpush.bf16.msra.mxu0 %v1438
    %1733 = vmatpush.bf16.msra.mxu0 %v1430
    %1734 = vmatpush.bf16.msra.mxu0 %v1422
    %1735 = vmatmul.bf16.gmra.mxu0 %v823
    %v1736 = vpop.f32.mrf.mxu0
    %v1737 = vadd.f32 %v1724, %v1736
    %v1738 = vpop.f32.mrf.mxu0
    %1739 = vdwg.mxu0
    %1740 = vmatpush.bf16.msra.mxu0 %v1415
    %1741 = vmatpush.bf16.msra.mxu0 %v1407
    %1742 = vmatpush.bf16.msra.mxu0 %v1399
    %1743 = vmatpush.bf16.msra.mxu0 %v1391
    %1744 = vmatpush.bf16.msra.mxu0 %v1383
    %1745 = vmatpush.bf16.msra.mxu0 %v1375
    %1746 = vmatpush.bf16.msra.mxu0 %v1367
    %1747 = vmatpush.bf16.msra.mxu0 %v1359
    %1748 = vmatmul.bf16.gmra.mxu0 %v822
    %v1749 = vpop.f32.mrf.mxu0
    %v1750 = vadd.f32 %v959, %v1749
    %v1751 = vpop.f32.mrf.mxu0
    %1752 = vdwg.mxu0
    %1753 = vmatpush.bf16.msra.mxu0 %v1479
    %1754 = vmatpush.bf16.msra.mxu0 %v1471
    %1755 = vmatpush.bf16.msra.mxu0 %v1463
    %1756 = vmatpush.bf16.msra.mxu0 %v1455
    %1757 = vmatpush.bf16.msra.mxu0 %v1447
    %1758 = vmatpush.bf16.msra.mxu0 %v1439
    %1759 = vmatpush.bf16.msra.mxu0 %v1431
    %1760 = vmatpush.bf16.msra.mxu0 %v1423
    %1761 = vmatmul.bf16.gmra.mxu0 %v823
    %v1762 = vpop.f32.mrf.mxu0
    %v1763 = vadd.f32 %v1750, %v1762
    %v1764 = vpop.f32.mrf.mxu0
    %1765 = vdwg.mxu0
    %1766 = vmatpush.bf16.msra.mxu0 %v1416
    %1767 = vmatpush.bf16.msra.mxu0 %v1408
    %1768 = vmatpush.bf16.msra.mxu0 %v1400
    %1769 = vmatpush.bf16.msra.mxu0 %v1392
    %1770 = vmatpush.bf16.msra.mxu0 %v1384
    %1771 = vmatpush.bf16.msra.mxu0 %v1376
    %1772 = vmatpush.bf16.msra.mxu0 %v1368
    %1773 = vmatpush.bf16.msra.mxu0 %v1360
    %1774 = vmatmul.bf16.gmra.mxu0 %v822
    %v1775 = vpop.f32.mrf.mxu0
    %v1776 = vadd.f32 %v960, %v1775
    %v1777 = vpop.f32.mrf.mxu0
    %1778 = vdwg.mxu0
    %1779 = vmatpush.bf16.msra.mxu0 %v1480
    %1780 = vmatpush.bf16.msra.mxu0 %v1472
    %1781 = vmatpush.bf16.msra.mxu0 %v1464
    %1782 = vmatpush.bf16.msra.mxu0 %v1456
    %1783 = vmatpush.bf16.msra.mxu0 %v1448
    %1784 = vmatpush.bf16.msra.mxu0 %v1440
    %1785 = vmatpush.bf16.msra.mxu0 %v1432
    %1786 = vmatpush.bf16.msra.mxu0 %v1424
    %1787 = vmatmul.bf16.gmra.mxu0 %v823
    %v1788 = vpop.f32.mrf.mxu0
    %v1789 = vadd.f32 %v1776, %v1788
    %v1790 = vpop.f32.mrf.mxu0
    %1791 = vdwg.mxu0
    %1792 = vmatpush.bf16.msra.mxu0 %v1417
    %1793 = vmatpush.bf16.msra.mxu0 %v1409
    %1794 = vmatpush.bf16.msra.mxu0 %v1401
    %1795 = vmatpush.bf16.msra.mxu0 %v1393
    %1796 = vmatpush.bf16.msra.mxu0 %v1385
    %1797 = vmatpush.bf16.msra.mxu0 %v1377
    %1798 = vmatpush.bf16.msra.mxu0 %v1369
    %1799 = vmatpush.bf16.msra.mxu0 %v1361
    %1800 = vmatmul.bf16.gmra.mxu0 %v822
    %v1801 = vpop.f32.mrf.mxu0
    %v1802 = vadd.f32 %v961, %v1801
    %v1803 = vpop.f32.mrf.mxu0
    %1804 = vdwg.mxu0
    %1805 = vmatpush.bf16.msra.mxu0 %v1481
    %1806 = vmatpush.bf16.msra.mxu0 %v1473
    %1807 = vmatpush.bf16.msra.mxu0 %v1465
    %1808 = vmatpush.bf16.msra.mxu0 %v1457
    %1809 = vmatpush.bf16.msra.mxu0 %v1449
    %1810 = vmatpush.bf16.msra.mxu0 %v1441
    %1811 = vmatpush.bf16.msra.mxu0 %v1433
    %1812 = vmatpush.bf16.msra.mxu0 %v1425
    %1813 = vmatmul.bf16.gmra.mxu0 %v823
    %v1814 = vpop.f32.mrf.mxu0
    %v1815 = vadd.f32 %v1802, %v1814
    %v1816 = vpop.f32.mrf.mxu0
    %1817 = vdwg.mxu0
    %1818 = vst [vmem:[#allocation14] sm:$0xff] %v1633
    %1819 = vst [vmem:[#allocation14 + $0x8] sm:$0xff] %v1659
    %1820 = vst [vmem:[#allocation14 + $0x10] sm:$0xff] %v1685
    %1821 = vst [vmem:[#allocation14 + $0x18] sm:$0xff] %v1711
    %1822 = vst [vmem:[#allocation14 + $0x20] sm:$0xff] %v1737
    %1823 = vst [vmem:[#allocation14 + $0x28] sm:$0xff] %v1763
    %1824 = vst [vmem:[#allocation14 + $0x30] sm:$0xff] %v1789
    %1825 = vst [vmem:[#allocation14 + $0x38] sm:$0xff] %v1815
    // Predicated region
    $region66: #{tpu_custom_call.1} parent=1 // pred_check
      _
    $region67: #{tpu_custom_call.1} parent=1 // pred_check_branch
      %1827 = sbr.rel (0) target = $region69
    $region68: #{tpu_custom_call.1} parent=1 // pred_region
      %1829 = vsyncadd [#allocation4], 0
      %s1831 = sshll.u32 [#allocation14], 4
      %s1832 = int_to_ptr.vmem [resolvable:$true] %s1831
      %s1833 = sshll.u32 %s9, 4
      %s1834 = int_to_ptr.hbm [resolvable:$true] %s1833
      %1836 = dma.vmem_to_hbm [thread:$0]  %s1832, 1024, %s1834, [#allocation4]
    $region69: #{tpu_custom_call.1} parent=1 // pred_fallthru
      _
    // Predicated region
    $region70: #{tpu_custom_call.1} parent=1 // pred_check
      _
    $region71: #{tpu_custom_call.1} parent=1 // pred_check_branch
      %1838 = sbr.rel (0) target = $region73
    $region72: #{tpu_custom_call.1} parent=1 // pred_region
      %1840 = dma.done [#allocation4], 1024
    $region73: #{tpu_custom_call.1} parent=1 // pred_fallthru
      _
    %1841 = vsyncpa [#allocation3], 1
    %1842 = vsyncpa [#allocation6], 1
    %1843 = vsyncpa [#allocation9], 1
    %1844 = vsyncpa [#allocation12], 1
    %1845 = vsyncpa [#allocation4], 1

</llo_original>
